<compile_context>
chip_gen: v7x
topology: tpu7x:2x2x1
jax: 0.10.0
libtpu: 0.0.40
codegen_flags: <defaults>
</compile_context>

<pallas_src>
import functools

import jax
import jax.numpy as jnp
from jax.experimental import pallas as pl
from jax.experimental.pallas import tpu as pltpu

EPS = 1e-5


def _unmasked_taps(kernel_size):
    """(kh, kw) taps kept by the type-'B' PixelCNN mask (centre included)."""
    K = kernel_size
    U, V = K // 2, K // 2
    return tuple((kh, kw) for kh in range(K) for kw in range(K)
                 if kh < U or (kh == U and kw <= V))


def _resblock_kernel(x_ref, w1_ref, g1_ref, b1_ref, w2_ref, g2_ref, b2_ref,
                     o_ref, pad_ref, *, N, H, W, C, K, taps):
    """Whole residual block for one small tensor, fully resident in VMEM.

    x_ref   : (W, N, H, C)          activations, w-major pixel order
    w*_ref  : (T, C, C)             pre-masked per-tap conv weights
    g*,b*   : (1, C)                BatchNorm affine params
    o_ref   : (W*N*H, C)            output, same (w, n, h) pixel order
    pad_ref : (W+2P, N, H+2P, C)    zero-padded activation scratch
    """
    P = K // 2
    R = W * N * H                     # number of pixels = rows of working mats

    # Zero ONLY the halo ring; the interior is rewritten before each conv and
    # the halo is never touched again, so it stays zero for both convs.
    pad_ref[:P, :, :, :] = jnp.zeros((P, N, H + 2 * P, C), jnp.float32)
    pad_ref[W + P:, :, :, :] = jnp.zeros((P, N, H + 2 * P, C), jnp.float32)
    pad_ref[P:W + P, :, :P, :] = jnp.zeros((W, N, P, C), jnp.float32)
    pad_ref[P:W + P, :, H + P:, :] = jnp.zeros((W, N, P, C), jnp.float32)

    def conv(inp_wnhc, w_ref):
        """Masked 'B' conv: T per-tap MXU matmuls accumulated in registers."""
        pad_ref[P:P + W, :, P:P + H, :] = inp_wnhc
        acc = None
        for t, (kh, kw) in enumerate(taps):
            # Leading-dim collapse only on the loaded tap slice (the minor
            # channel dim is untouched).
            lhs = pad_ref[kw:kw + W, :, kh:kh + H, :].reshape(R, C)
            d = jnp.dot(lhs, w_ref[t], preferred_element_type=jnp.float32)
            acc = d if acc is None else acc + d
        return acc                                              # (R, C) f32

    def bn_scale_shift(h, g_ref, b_ref):
        """Training-mode BN folded to a per-channel scale/shift (one pass)."""
        inv_n = 1.0 / R
        s = jnp.sum(h, axis=0, keepdims=True)                   # (1, C)
        ss = jnp.sum(h * h, axis=0, keepdims=True)
        mean = s * inv_n
        # clamp: one-pass E[x^2]-E[x]^2 can cancel slightly negative
        var = jnp.maximum(ss * inv_n - mean * mean, 0.0)
        inv = jax.lax.rsqrt(var + EPS)                           # EUP
        scale = g_ref[...] * inv
        shift = b_ref[...] - mean * scale
        return scale, shift

    x4 = x_ref[...]                                              # (W,N,H,C)
    x2 = x4.reshape(R, C)                                        # residual

    # conv1 -> ReLU -> BN1 (affine applied once to the full value)
    h = conv(x4, w1_ref)
    h = jnp.maximum(h, 0.0)
    sc1, sh1 = bn_scale_shift(h, g1_ref, b1_ref)
    h = h * sc1 + sh1

    # conv2 -> +x -> ReLU
    h = conv(h.reshape(W, N, H, C), w2_ref)
    y = jnp.maximum(h + x2, 0.0)

    # BN2 affine applied once, single full-ref store (no per-w column stores).
    sc2, sh2 = bn_scale_shift(y, g2_ref, b2_ref)
    o_ref[...] = y * sc2 + sh2


def pixelcnn_resblock(x_nchw, w1_hwio, g1, b1, w2_hwio, g2, b2):
    """x_nchw: (N, C, H, W) f32; conv weights in HWIO (K, K, Cin, Cout)."""
    N, C, H, W = x_nchw.shape
    K = w1_hwio.shape[0]
    P = K // 2
    taps = _unmasked_taps(K)

    # w-major activation layout for the kernel: (W, N, H, C).
    # (Wrapper-side transposes are acceptable at this toy size; see TODO above
    # for the production plan that avoids the extra HBM round trips.)
    x_wnhc = jnp.transpose(x_nchw, (3, 0, 2, 1)).astype(jnp.float32)

    def stack_w(w):
        # Keeping only the unmasked taps == applying the type-'B' mask.
        return jnp.stack([w[kh, kw] for kh, kw in taps], axis=0).astype(jnp.float32)

    w1s, w2s = stack_w(w1_hwio), stack_w(w2_hwio)

    vmem = pl.BlockSpec(memory_space=pltpu.MemorySpace.VMEM)
    out = pl.pallas_call(
        functools.partial(_resblock_kernel, N=N, H=H, W=W, C=C, K=K, taps=taps),
        out_shape=jax.ShapeDtypeStruct((W * N * H, C), jnp.float32),
        in_specs=[vmem] * 7,
        out_specs=vmem,
        scratch_shapes=[
            pltpu.VMEM((W + 2 * P, N, H + 2 * P, C), jnp.float32),  # padded act
        ],
        compiler_params=pltpu.CompilerParams(vmem_limit_bytes=32 * 1024 * 1024),
    )(x_wnhc, w1s, g1.reshape(1, C), b1.reshape(1, C),
      w2s, g2.reshape(1, C), b2.reshape(1, C))

    out = out.reshape(W, N, H, C)
    return jnp.transpose(out, (1, 3, 2, 0))                      # (N, C, H, W)


def _reference(x_nchw, w1_hwio, g1, b1, w2_hwio, g2, b2):
    """Pure-JAX reference for verification."""
    K = w1_hwio.shape[0]
    P = K // 2

    def conv(x, w):
        return jax.lax.conv_general_dilated(
            x, w, (1, 1), [(P, P), (P, P)],
            dimension_numbers=('NHWC', 'HWIO', 'NHWC'))

    def bn(h, g, b):
        mean = h.mean(axis=(0, 1, 2), keepdims=True)
        var = ((h - mean) ** 2).mean(axis=(0, 1, 2), keepdims=True)
        return (h - mean) * jax.lax.rsqrt(var + EPS) * g + b

    x = jnp.transpose(x_nchw, (0, 2, 3, 1))
    h = conv(x, w1_hwio)
    h = jnp.maximum(h, 0.0)
    h = bn(h, g1, b1)
    h = conv(h, w2_hwio)
    y = jnp.maximum(h + x, 0.0)
    y = bn(y, g2, b2)
    return jnp.transpose(y, (0, 3, 1, 2))


if __name__ == "__main__":
    # Small, deterministic problem: batch=2, num_filters=32, spatial=8, K=3.
    N, C, H, W, K = 2, 32, 8, 8, 3

    key = jax.random.PRNGKey(0)
    kx, k1, k2, kg1, kb1, kg2, kb2 = jax.random.split(key, 7)

    x = jax.random.normal(kx, (N, C, H, W), jnp.float32)

    # Type-'B' PixelCNN mask over the (K, K) spatial taps.
    mask = jnp.zeros((K, K), jnp.float32)
    for kh, kw in _unmasked_taps(K):
        mask = mask.at[kh, kw].set(1.0)

    w1 = jax.random.normal(k1, (K, K, C, C), jnp.float32) * (0.1 / (K * K))
    w2 = jax.random.normal(k2, (K, K, C, C), jnp.float32) * (0.1 / (K * K))
    w1 = w1 * mask[:, :, None, None]
    w2 = w2 * mask[:, :, None, None]

    # BatchNorm affine params (non-trivial values to exercise the affine path).
    g1 = 1.0 + 0.1 * jax.random.normal(kg1, (C,), jnp.float32)
    b1 = 0.1 * jax.random.normal(kb1, (C,), jnp.float32)
    g2 = 1.0 + 0.1 * jax.random.normal(kg2, (C,), jnp.float32)
    b2 = 0.1 * jax.random.normal(kb2, (C,), jnp.float32)

    out = pixelcnn_resblock(x, w1, g1, b1, w2, g2, b2)
    out = jax.block_until_ready(out)

    ref = jax.block_until_ready(_reference(x, w1, g1, b1, w2, g2, b2))
    assert out.shape == (N, C, H, W)
    assert jnp.allclose(out, ref, rtol=2e-4, atol=2e-4), (
        "mismatch, max abs diff = %e" % float(jnp.max(jnp.abs(out - ref))))

    print("KERNEL_OK")
</pallas_src>

<mosaic_0001>
module attributes {stable_mosaic.version = 11 : i64} {
  func.func @_resblock_kernel(%arg0: memref<8x2x8x32xf32, #tpu.memory_space<vmem>>, %arg1: memref<5x32x32xf32, #tpu.memory_space<vmem>>, %arg2: memref<1x32xf32, #tpu.memory_space<vmem>>, %arg3: memref<1x32xf32, #tpu.memory_space<vmem>>, %arg4: memref<5x32x32xf32, #tpu.memory_space<vmem>>, %arg5: memref<1x32xf32, #tpu.memory_space<vmem>>, %arg6: memref<1x32xf32, #tpu.memory_space<vmem>>, %arg7: memref<128x32xf32, #tpu.memory_space<vmem>>, %arg8: memref<10x2x10x32xf32, #tpu.memory_space<vmem>>) attributes {dimension_semantics = [], scalar_prefetch = 0 : i64, scratch_operands = 1 : i64, tpu.core_type = #tpu.core_type<tc>} {
    %cst = arith.constant 0.000000e+00 : f32
    %0 = vector.broadcast %cst : f32 to vector<1x2x10x32xf32>
    %c0 = arith.constant 0 : index
    %c0_0 = arith.constant 0 : index
    %c0_1 = arith.constant 0 : index
    %c0_2 = arith.constant 0 : index
    %1 = vector.load %arg8[%c0, %c0_0, %c0_1, %c0_2] : memref<10x2x10x32xf32, #tpu.memory_space<vmem>>, vector<1x2x10x32xf32>
    tpu.vector_store %arg8[%c0, %c0_0, %c0_1, %c0_2], %0 {strides = array<i32>} : memref<10x2x10x32xf32, #tpu.memory_space<vmem>>, vector<1x2x10x32xf32>,
    %cst_3 = arith.constant 0.000000e+00 : f32
    %2 = vector.broadcast %cst_3 : f32 to vector<1x2x10x32xf32>
    %c9 = arith.constant 9 : index
    %c0_4 = arith.constant 0 : index
    %c0_5 = arith.constant 0 : index
    %c0_6 = arith.constant 0 : index
    %3 = vector.load %arg8[%c9, %c0_4, %c0_5, %c0_6] : memref<10x2x10x32xf32, #tpu.memory_space<vmem>>, vector<1x2x10x32xf32>
    tpu.vector_store %arg8[%c9, %c0_4, %c0_5, %c0_6], %2 {strides = array<i32>} : memref<10x2x10x32xf32, #tpu.memory_space<vmem>>, vector<1x2x10x32xf32>,
    %cst_7 = arith.constant 0.000000e+00 : f32
    %4 = vector.broadcast %cst_7 : f32 to vector<8x2x1x32xf32>
    %c1 = arith.constant 1 : index
    %c0_8 = arith.constant 0 : index
    %c0_9 = arith.constant 0 : index
    %c0_10 = arith.constant 0 : index
    %5 = vector.load %arg8[%c1, %c0_8, %c0_9, %c0_10] : memref<10x2x10x32xf32, #tpu.memory_space<vmem>>, vector<8x2x1x32xf32>
    tpu.vector_store %arg8[%c1, %c0_8, %c0_9, %c0_10], %4 {strides = array<i32>} : memref<10x2x10x32xf32, #tpu.memory_space<vmem>>, vector<8x2x1x32xf32>,
    %cst_11 = arith.constant 0.000000e+00 : f32
    %6 = vector.broadcast %cst_11 : f32 to vector<8x2x1x32xf32>
    %c1_12 = arith.constant 1 : index
    %c0_13 = arith.constant 0 : index
    %c9_14 = arith.constant 9 : index
    %c0_15 = arith.constant 0 : index
    %7 = vector.load %arg8[%c1_12, %c0_13, %c9_14, %c0_15] : memref<10x2x10x32xf32, #tpu.memory_space<vmem>>, vector<8x2x1x32xf32>
    tpu.vector_store %arg8[%c1_12, %c0_13, %c9_14, %c0_15], %6 {strides = array<i32>} : memref<10x2x10x32xf32, #tpu.memory_space<vmem>>, vector<8x2x1x32xf32>,
    %c0_16 = arith.constant 0 : index
    %c0_17 = arith.constant 0 : index
    %c0_18 = arith.constant 0 : index
    %c0_19 = arith.constant 0 : index
    %8 = vector.load %arg0[%c0_16, %c0_17, %c0_18, %c0_19] : memref<8x2x8x32xf32, #tpu.memory_space<vmem>>, vector<8x2x8x32xf32>
    %9 = vector.shape_cast %8 : vector<8x2x8x32xf32> to vector<128x32xf32>
    %c1_20 = arith.constant 1 : index
    %c0_21 = arith.constant 0 : index
    %c1_22 = arith.constant 1 : index
    %c0_23 = arith.constant 0 : index
    %10 = vector.load %arg8[%c1_20, %c0_21, %c1_22, %c0_23] : memref<10x2x10x32xf32, #tpu.memory_space<vmem>>, vector<8x2x8x32xf32>
    tpu.vector_store %arg8[%c1_20, %c0_21, %c1_22, %c0_23], %8 {strides = array<i32>} : memref<10x2x10x32xf32, #tpu.memory_space<vmem>>, vector<8x2x8x32xf32>,
    %c0_24 = arith.constant 0 : index
    %c0_25 = arith.constant 0 : index
    %c0_26 = arith.constant 0 : index
    %c0_27 = arith.constant 0 : index
    %11 = vector.load %arg8[%c0_24, %c0_25, %c0_26, %c0_27] : memref<10x2x10x32xf32, #tpu.memory_space<vmem>>, vector<8x2x8x32xf32>
    %12 = vector.shape_cast %11 : vector<8x2x8x32xf32> to vector<128x32xf32>
    %c0_28 = arith.constant 0 : index
    %c0_29 = arith.constant 0 : index
    %c0_30 = arith.constant 0 : index
    %13 = vector.load %arg1[%c0_28, %c0_29, %c0_30] : memref<5x32x32xf32, #tpu.memory_space<vmem>>, vector<1x32x32xf32>
    %14 = vector.shape_cast %13 : vector<1x32x32xf32> to vector<32x32xf32>
    %cst_31 = arith.constant dense<0.000000e+00> : vector<128x32xf32>
    %15 = tpu.matmul %12, %14, %cst_31 {dimension_numbers = #tpu.dot_dimension_numbers<[1], [0], [0], [1], [0, 0, 1, 1], [], []>} : vector<128x32xf32>, vector<32x32xf32>, vector<128x32xf32> -> vector<128x32xf32>
    %c1_32 = arith.constant 1 : index
    %c0_33 = arith.constant 0 : index
    %c0_34 = arith.constant 0 : index
    %c0_35 = arith.constant 0 : index
    %16 = vector.load %arg8[%c1_32, %c0_33, %c0_34, %c0_35] : memref<10x2x10x32xf32, #tpu.memory_space<vmem>>, vector<8x2x8x32xf32>
    %17 = vector.shape_cast %16 : vector<8x2x8x32xf32> to vector<128x32xf32>
    %c1_36 = arith.constant 1 : index
    %c0_37 = arith.constant 0 : index
    %c0_38 = arith.constant 0 : index
    %18 = vector.load %arg1[%c1_36, %c0_37, %c0_38] : memref<5x32x32xf32, #tpu.memory_space<vmem>>, vector<1x32x32xf32>
    %19 = vector.shape_cast %18 : vector<1x32x32xf32> to vector<32x32xf32>
    %cst_39 = arith.constant dense<0.000000e+00> : vector<128x32xf32>
    %20 = tpu.matmul %17, %19, %cst_39 {dimension_numbers = #tpu.dot_dimension_numbers<[1], [0], [0], [1], [0, 0, 1, 1], [], []>} : vector<128x32xf32>, vector<32x32xf32>, vector<128x32xf32> -> vector<128x32xf32>
    %21 = arith.addf %15, %20 : vector<128x32xf32>
    %c2 = arith.constant 2 : index
    %c0_40 = arith.constant 0 : index
    %c0_41 = arith.constant 0 : index
    %c0_42 = arith.constant 0 : index
    %22 = vector.load %arg8[%c2, %c0_40, %c0_41, %c0_42] : memref<10x2x10x32xf32, #tpu.memory_space<vmem>>, vector<8x2x8x32xf32>
    %23 = vector.shape_cast %22 : vector<8x2x8x32xf32> to vector<128x32xf32>
    %c2_43 = arith.constant 2 : index
    %c0_44 = arith.constant 0 : index
    %c0_45 = arith.constant 0 : index
    %24 = vector.load %arg1[%c2_43, %c0_44, %c0_45] : memref<5x32x32xf32, #tpu.memory_space<vmem>>, vector<1x32x32xf32>
    %25 = vector.shape_cast %24 : vector<1x32x32xf32> to vector<32x32xf32>
    %cst_46 = arith.constant dense<0.000000e+00> : vector<128x32xf32>
    %26 = tpu.matmul %23, %25, %cst_46 {dimension_numbers = #tpu.dot_dimension_numbers<[1], [0], [0], [1], [0, 0, 1, 1], [], []>} : vector<128x32xf32>, vector<32x32xf32>, vector<128x32xf32> -> vector<128x32xf32>
    %27 = arith.addf %21, %26 : vector<128x32xf32>
    %c0_47 = arith.constant 0 : index
    %c0_48 = arith.constant 0 : index
    %c1_49 = arith.constant 1 : index
    %c0_50 = arith.constant 0 : index
    %28 = vector.load %arg8[%c0_47, %c0_48, %c1_49, %c0_50] : memref<10x2x10x32xf32, #tpu.memory_space<vmem>>, vector<8x2x8x32xf32>
    %29 = vector.shape_cast %28 : vector<8x2x8x32xf32> to vector<128x32xf32>
    %c3 = arith.constant 3 : index
    %c0_51 = arith.constant 0 : index
    %c0_52 = arith.constant 0 : index
    %30 = vector.load %arg1[%c3, %c0_51, %c0_52] : memref<5x32x32xf32, #tpu.memory_space<vmem>>, vector<1x32x32xf32>
    %31 = vector.shape_cast %30 : vector<1x32x32xf32> to vector<32x32xf32>
    %cst_53 = arith.constant dense<0.000000e+00> : vector<128x32xf32>
    %32 = tpu.matmul %29, %31, %cst_53 {dimension_numbers = #tpu.dot_dimension_numbers<[1], [0], [0], [1], [0, 0, 1, 1], [], []>} : vector<128x32xf32>, vector<32x32xf32>, vector<128x32xf32> -> vector<128x32xf32>
    %33 = arith.addf %27, %32 : vector<128x32xf32>
    %c1_54 = arith.constant 1 : index
    %c0_55 = arith.constant 0 : index
    %c1_56 = arith.constant 1 : index
    %c0_57 = arith.constant 0 : index
    %34 = vector.load %arg8[%c1_54, %c0_55, %c1_56, %c0_57] : memref<10x2x10x32xf32, #tpu.memory_space<vmem>>, vector<8x2x8x32xf32>
    %35 = vector.shape_cast %34 : vector<8x2x8x32xf32> to vector<128x32xf32>
    %c4 = arith.constant 4 : index
    %c0_58 = arith.constant 0 : index
    %c0_59 = arith.constant 0 : index
    %36 = vector.load %arg1[%c4, %c0_58, %c0_59] : memref<5x32x32xf32, #tpu.memory_space<vmem>>, vector<1x32x32xf32>
    %37 = vector.shape_cast %36 : vector<1x32x32xf32> to vector<32x32xf32>
    %cst_60 = arith.constant dense<0.000000e+00> : vector<128x32xf32>
    %38 = tpu.matmul %35, %37, %cst_60 {dimension_numbers = #tpu.dot_dimension_numbers<[1], [0], [0], [1], [0, 0, 1, 1], [], []>} : vector<128x32xf32>, vector<32x32xf32>, vector<128x32xf32> -> vector<128x32xf32>
    %39 = arith.addf %33, %38 : vector<128x32xf32>
    %cst_61 = arith.constant 0.000000e+00 : f32
    %40 = vector.broadcast %cst_61 : f32 to vector<128x32xf32>
    %41 = arith.maximumf %39, %40 : vector<128x32xf32>
    %cst_62 = arith.constant dense<0.000000e+00> : vector<32xf32>
    %42 = vector.multi_reduction <add>, %41, %cst_62 [0] : vector<128x32xf32> to vector<32xf32>
    %43 = vector.shape_cast %42 : vector<32xf32> to vector<1x32xf32>
    %44 = arith.mulf %41, %41 : vector<128x32xf32>
    %cst_63 = arith.constant dense<0.000000e+00> : vector<32xf32>
    %45 = vector.multi_reduction <add>, %44, %cst_63 [0] : vector<128x32xf32> to vector<32xf32>
    %46 = vector.shape_cast %45 : vector<32xf32> to vector<1x32xf32>
    %cst_64 = arith.constant 7.812500e-03 : f32
    %47 = vector.broadcast %cst_64 : f32 to vector<1x32xf32>
    %48 = arith.mulf %43, %47 : vector<1x32xf32>
    %cst_65 = arith.constant 7.812500e-03 : f32
    %49 = vector.broadcast %cst_65 : f32 to vector<1x32xf32>
    %50 = arith.mulf %46, %49 : vector<1x32xf32>
    %51 = arith.mulf %48, %48 : vector<1x32xf32>
    %52 = arith.subf %50, %51 : vector<1x32xf32>
    %cst_66 = arith.constant 0.000000e+00 : f32
    %53 = vector.broadcast %cst_66 : f32 to vector<1x32xf32>
    %54 = arith.maximumf %52, %53 : vector<1x32xf32>
    %cst_67 = arith.constant 9.99999974E-6 : f32
    %55 = vector.broadcast %cst_67 : f32 to vector<1x32xf32>
    %56 = arith.addf %54, %55 : vector<1x32xf32>
    %57 = math.rsqrt %56 : vector<1x32xf32>
    %c0_68 = arith.constant 0 : index
    %c0_69 = arith.constant 0 : index
    %58 = vector.load %arg2[%c0_68, %c0_69] : memref<1x32xf32, #tpu.memory_space<vmem>>, vector<1x32xf32>
    %59 = arith.mulf %58, %57 : vector<1x32xf32>
    %c0_70 = arith.constant 0 : index
    %c0_71 = arith.constant 0 : index
    %60 = vector.load %arg3[%c0_70, %c0_71] : memref<1x32xf32, #tpu.memory_space<vmem>>, vector<1x32xf32>
    %61 = arith.mulf %48, %59 : vector<1x32xf32>
    %62 = arith.subf %60, %61 : vector<1x32xf32>
    %63 = vector.broadcast %59 : vector<1x32xf32> to vector<128x32xf32>
    %64 = arith.mulf %41, %63 : vector<128x32xf32>
    %65 = vector.broadcast %62 : vector<1x32xf32> to vector<128x32xf32>
    %66 = arith.addf %64, %65 : vector<128x32xf32>
    %67 = vector.shape_cast %66 : vector<128x32xf32> to vector<8x2x8x32xf32>
    %c1_72 = arith.constant 1 : index
    %c0_73 = arith.constant 0 : index
    %c1_74 = arith.constant 1 : index
    %c0_75 = arith.constant 0 : index
    %68 = vector.load %arg8[%c1_72, %c0_73, %c1_74, %c0_75] : memref<10x2x10x32xf32, #tpu.memory_space<vmem>>, vector<8x2x8x32xf32>
    tpu.vector_store %arg8[%c1_72, %c0_73, %c1_74, %c0_75], %67 {strides = array<i32>} : memref<10x2x10x32xf32, #tpu.memory_space<vmem>>, vector<8x2x8x32xf32>,
    %c0_76 = arith.constant 0 : index
    %c0_77 = arith.constant 0 : index
    %c0_78 = arith.constant 0 : index
    %c0_79 = arith.constant 0 : index
    %69 = vector.load %arg8[%c0_76, %c0_77, %c0_78, %c0_79] : memref<10x2x10x32xf32, #tpu.memory_space<vmem>>, vector<8x2x8x32xf32>
    %70 = vector.shape_cast %69 : vector<8x2x8x32xf32> to vector<128x32xf32>
    %c0_80 = arith.constant 0 : index
    %c0_81 = arith.constant 0 : index
    %c0_82 = arith.constant 0 : index
    %71 = vector.load %arg4[%c0_80, %c0_81, %c0_82] : memref<5x32x32xf32, #tpu.memory_space<vmem>>, vector<1x32x32xf32>
    %72 = vector.shape_cast %71 : vector<1x32x32xf32> to vector<32x32xf32>
    %cst_83 = arith.constant dense<0.000000e+00> : vector<128x32xf32>
    %73 = tpu.matmul %70, %72, %cst_83 {dimension_numbers = #tpu.dot_dimension_numbers<[1], [0], [0], [1], [0, 0, 1, 1], [], []>} : vector<128x32xf32>, vector<32x32xf32>, vector<128x32xf32> -> vector<128x32xf32>
    %c1_84 = arith.constant 1 : index
    %c0_85 = arith.constant 0 : index
    %c0_86 = arith.constant 0 : index
    %c0_87 = arith.constant 0 : index
    %74 = vector.load %arg8[%c1_84, %c0_85, %c0_86, %c0_87] : memref<10x2x10x32xf32, #tpu.memory_space<vmem>>, vector<8x2x8x32xf32>
    %75 = vector.shape_cast %74 : vector<8x2x8x32xf32> to vector<128x32xf32>
    %c1_88 = arith.constant 1 : index
    %c0_89 = arith.constant 0 : index
    %c0_90 = arith.constant 0 : index
    %76 = vector.load %arg4[%c1_88, %c0_89, %c0_90] : memref<5x32x32xf32, #tpu.memory_space<vmem>>, vector<1x32x32xf32>
    %77 = vector.shape_cast %76 : vector<1x32x32xf32> to vector<32x32xf32>
    %cst_91 = arith.constant dense<0.000000e+00> : vector<128x32xf32>
    %78 = tpu.matmul %75, %77, %cst_91 {dimension_numbers = #tpu.dot_dimension_numbers<[1], [0], [0], [1], [0, 0, 1, 1], [], []>} : vector<128x32xf32>, vector<32x32xf32>, vector<128x32xf32> -> vector<128x32xf32>
    %79 = arith.addf %73, %78 : vector<128x32xf32>
    %c2_92 = arith.constant 2 : index
    %c0_93 = arith.constant 0 : index
    %c0_94 = arith.constant 0 : index
    %c0_95 = arith.constant 0 : index
    %80 = vector.load %arg8[%c2_92, %c0_93, %c0_94, %c0_95] : memref<10x2x10x32xf32, #tpu.memory_space<vmem>>, vector<8x2x8x32xf32>
    %81 = vector.shape_cast %80 : vector<8x2x8x32xf32> to vector<128x32xf32>
    %c2_96 = arith.constant 2 : index
    %c0_97 = arith.constant 0 : index
    %c0_98 = arith.constant 0 : index
    %82 = vector.load %arg4[%c2_96, %c0_97, %c0_98] : memref<5x32x32xf32, #tpu.memory_space<vmem>>, vector<1x32x32xf32>
    %83 = vector.shape_cast %82 : vector<1x32x32xf32> to vector<32x32xf32>
    %cst_99 = arith.constant dense<0.000000e+00> : vector<128x32xf32>
    %84 = tpu.matmul %81, %83, %cst_99 {dimension_numbers = #tpu.dot_dimension_numbers<[1], [0], [0], [1], [0, 0, 1, 1], [], []>} : vector<128x32xf32>, vector<32x32xf32>, vector<128x32xf32> -> vector<128x32xf32>
    %85 = arith.addf %79, %84 : vector<128x32xf32>
    %c0_100 = arith.constant 0 : index
    %c0_101 = arith.constant 0 : index
    %c1_102 = arith.constant 1 : index
    %c0_103 = arith.constant 0 : index
    %86 = vector.load %arg8[%c0_100, %c0_101, %c1_102, %c0_103] : memref<10x2x10x32xf32, #tpu.memory_space<vmem>>, vector<8x2x8x32xf32>
    %87 = vector.shape_cast %86 : vector<8x2x8x32xf32> to vector<128x32xf32>
    %c3_104 = arith.constant 3 : index
    %c0_105 = arith.constant 0 : index
    %c0_106 = arith.constant 0 : index
    %88 = vector.load %arg4[%c3_104, %c0_105, %c0_106] : memref<5x32x32xf32, #tpu.memory_space<vmem>>, vector<1x32x32xf32>
    %89 = vector.shape_cast %88 : vector<1x32x32xf32> to vector<32x32xf32>
    %cst_107 = arith.constant dense<0.000000e+00> : vector<128x32xf32>
    %90 = tpu.matmul %87, %89, %cst_107 {dimension_numbers = #tpu.dot_dimension_numbers<[1], [0], [0], [1], [0, 0, 1, 1], [], []>} : vector<128x32xf32>, vector<32x32xf32>, vector<128x32xf32> -> vector<128x32xf32>
    %91 = arith.addf %85, %90 : vector<128x32xf32>
    %c1_108 = arith.constant 1 : index
    %c0_109 = arith.constant 0 : index
    %c1_110 = arith.constant 1 : index
    %c0_111 = arith.constant 0 : index
    %92 = vector.load %arg8[%c1_108, %c0_109, %c1_110, %c0_111] : memref<10x2x10x32xf32, #tpu.memory_space<vmem>>, vector<8x2x8x32xf32>
    %93 = vector.shape_cast %92 : vector<8x2x8x32xf32> to vector<128x32xf32>
    %c4_112 = arith.constant 4 : index
    %c0_113 = arith.constant 0 : index
    %c0_114 = arith.constant 0 : index
    %94 = vector.load %arg4[%c4_112, %c0_113, %c0_114] : memref<5x32x32xf32, #tpu.memory_space<vmem>>, vector<1x32x32xf32>
    %95 = vector.shape_cast %94 : vector<1x32x32xf32> to vector<32x32xf32>
    %cst_115 = arith.constant dense<0.000000e+00> : vector<128x32xf32>
    %96 = tpu.matmul %93, %95, %cst_115 {dimension_numbers = #tpu.dot_dimension_numbers<[1], [0], [0], [1], [0, 0, 1, 1], [], []>} : vector<128x32xf32>, vector<32x32xf32>, vector<128x32xf32> -> vector<128x32xf32>
    %97 = arith.addf %91, %96 : vector<128x32xf32>
    %98 = arith.addf %97, %9 : vector<128x32xf32>
    %cst_116 = arith.constant 0.000000e+00 : f32
    %99 = vector.broadcast %cst_116 : f32 to vector<128x32xf32>
    %100 = arith.maximumf %98, %99 : vector<128x32xf32>
    %cst_117 = arith.constant dense<0.000000e+00> : vector<32xf32>
    %101 = vector.multi_reduction <add>, %100, %cst_117 [0] : vector<128x32xf32> to vector<32xf32>
    %102 = vector.shape_cast %101 : vector<32xf32> to vector<1x32xf32>
    %103 = arith.mulf %100, %100 : vector<128x32xf32>
    %cst_118 = arith.constant dense<0.000000e+00> : vector<32xf32>
    %104 = vector.multi_reduction <add>, %103, %cst_118 [0] : vector<128x32xf32> to vector<32xf32>
    %105 = vector.shape_cast %104 : vector<32xf32> to vector<1x32xf32>
    %cst_119 = arith.constant 7.812500e-03 : f32
    %106 = vector.broadcast %cst_119 : f32 to vector<1x32xf32>
    %107 = arith.mulf %102, %106 : vector<1x32xf32>
    %cst_120 = arith.constant 7.812500e-03 : f32
    %108 = vector.broadcast %cst_120 : f32 to vector<1x32xf32>
    %109 = arith.mulf %105, %108 : vector<1x32xf32>
    %110 = arith.mulf %107, %107 : vector<1x32xf32>
    %111 = arith.subf %109, %110 : vector<1x32xf32>
    %cst_121 = arith.constant 0.000000e+00 : f32
    %112 = vector.broadcast %cst_121 : f32 to vector<1x32xf32>
    %113 = arith.maximumf %111, %112 : vector<1x32xf32>
    %cst_122 = arith.constant 9.99999974E-6 : f32
    %114 = vector.broadcast %cst_122 : f32 to vector<1x32xf32>
    %115 = arith.addf %113, %114 : vector<1x32xf32>
    %116 = math.rsqrt %115 : vector<1x32xf32>
    %c0_123 = arith.constant 0 : index
    %c0_124 = arith.constant 0 : index
    %117 = vector.load %arg5[%c0_123, %c0_124] : memref<1x32xf32, #tpu.memory_space<vmem>>, vector<1x32xf32>
    %118 = arith.mulf %117, %116 : vector<1x32xf32>
    %c0_125 = arith.constant 0 : index
    %c0_126 = arith.constant 0 : index
    %119 = vector.load %arg6[%c0_125, %c0_126] : memref<1x32xf32, #tpu.memory_space<vmem>>, vector<1x32xf32>
    %120 = arith.mulf %107, %118 : vector<1x32xf32>
    %121 = arith.subf %119, %120 : vector<1x32xf32>
    %122 = vector.broadcast %118 : vector<1x32xf32> to vector<128x32xf32>
    %123 = arith.mulf %100, %122 : vector<128x32xf32>
    %124 = vector.broadcast %121 : vector<1x32xf32> to vector<128x32xf32>
    %125 = arith.addf %123, %124 : vector<128x32xf32>
    %c0_127 = arith.constant 0 : index
    %c0_128 = arith.constant 0 : index
    %126 = vector.load %arg7[%c0_127, %c0_128] : memref<128x32xf32, #tpu.memory_space<vmem>>, vector<128x32xf32>
    tpu.vector_store %arg7[%c0_127, %c0_128], %125 {strides = array<i32>} : memref<128x32xf32, #tpu.memory_space<vmem>>, vector<128x32xf32>,
    return
  }
}

</mosaic_0001>

<llo_original>
// kernel: tpu_custom_call.1
$region0: #{tpu_custom_call.1}
  #allocation0 [shape = 'u32[]', space=smem, size = 0x4, offset = 0x4, fixed_abs, tag = 'smem constant byte address 0x4 - core index']
  #allocation1 [shape = 'u32[144,128]{1,0:T(1,128)}', space=vmem, size = 0x12000, scoped, tag = 'internal scratch']
  #allocation2 [shape = 'f32[10,2,10,32]{3,2,1,0:T(8,128)}', space=vmem, size = 0x28000, scoped, tag = 'scratch operand']
  %s0 = inlined_call_operand.hbm [shape: f32[8,2,8,32], index: 0, kind: input, shape index: {}]
  %s1 = inlined_call_operand.hbm [shape: f32[5,32,32], index: 1, kind: input, shape index: {}]
  %s2 = inlined_call_operand.vmem [shape: f32[1,32], index: 2, kind: input, shape index: {}]
  %s3 = inlined_call_operand.vmem [shape: f32[1,32], index: 3, kind: input, shape index: {}]
  %s4 = inlined_call_operand.hbm [shape: f32[5,32,32], index: 4, kind: input, shape index: {}]
  %s5 = inlined_call_operand.vmem [shape: f32[1,32], index: 5, kind: input, shape index: {}]
  %s6 = inlined_call_operand.vmem [shape: f32[1,32], index: 6, kind: input, shape index: {}]
  %s7 = inlined_call_operand.vmem [shape: f32[128,32], index: 7, kind: output, shape index: {}]
  %s8 = sld [smem:[#allocation0]]
  $region50: #{tpu_custom_call.1} parent=0
    _
  %s10 = ssub.s32 1, %s8
  %s11 = scalar_select 0, %s10, %s8
  $region1: #{tpu_custom_call.1} parent=0
    #allocation3 [shape = 'u8[65536]{0}', space=vmem, size = 0x10000, scoped, tag = 'input window, operand 0, single buffered']
    #allocation4 [shape = 's32[1]{0}', space=sflag, size = 0x4, scoped, tag = 'scoped memory for tpu_custom_call.1']
    #allocation5 [shape = 'u8[81920]{0}', space=vmem, size = 0x14000, scoped, tag = 'input window, operand 1, single buffered']
    #allocation6 [shape = 's32[1]{0}', space=sflag, size = 0x4, scoped, tag = 'scoped memory for tpu_custom_call.1']
    #allocation7 [shape = 'u8[81920]{0}', space=vmem, size = 0x14000, scoped, tag = 'input window, operand 4, single buffered']
    %12 = vsyncpa [#allocation4], 0
    %13 = vsyncpa [#allocation6], 0
    // Predicated region
    $region2: #{tpu_custom_call.1} parent=1 // pred_check
      _
    $region3: #{tpu_custom_call.1} parent=1 // pred_check_branch
      %15 = sbr.rel (0) target = $region5
    $region4: #{tpu_custom_call.1} parent=1 // pred_region
      %s17 = ssub.s32 2048, 2048
      %18 = vsyncadd [#allocation4], %s17
      %s19 = sshll.u32 [#allocation3], 4
      %s20 = int_to_ptr.vmem [resolvable:$true] %s19
      %25 = dma.hbm_to_vmem [thread:$0]  %s0, 2048, %s20, [#allocation4], 128, 128, 8
    $region5: #{tpu_custom_call.1} parent=1 // pred_fallthru
      _
    // Predicated region
    $region6: #{tpu_custom_call.1} parent=1 // pred_check
      _
    $region7: #{tpu_custom_call.1} parent=1 // pred_check_branch
      %27 = sbr.rel (0) target = $region9
    $region8: #{tpu_custom_call.1} parent=1 // pred_region
      %s29 = ssub.s32 2560, 2560
      %30 = vsyncadd [#allocation6], %s29
      %s31 = sshll.u32 [#allocation5], 4
      %s32 = int_to_ptr.vmem [resolvable:$true] %s31
      %37 = dma.hbm_to_vmem [thread:$0]  %s1, 2560, %s32, [#allocation6], 128, 128, 8
    $region9: #{tpu_custom_call.1} parent=1 // pred_fallthru
      _
    // Predicated region
    $region10: #{tpu_custom_call.1} parent=1 // pred_check
      _
    $region11: #{tpu_custom_call.1} parent=1 // pred_check_branch
      %39 = sbr.rel (0) target = $region13
    $region12: #{tpu_custom_call.1} parent=1 // pred_region
      _
    $region13: #{tpu_custom_call.1} parent=1 // pred_fallthru
      _
    // Predicated region
    $region14: #{tpu_custom_call.1} parent=1 // pred_check
      _
    $region15: #{tpu_custom_call.1} parent=1 // pred_check_branch
      %41 = sbr.rel (0) target = $region17
    $region16: #{tpu_custom_call.1} parent=1 // pred_region
      _
    $region17: #{tpu_custom_call.1} parent=1 // pred_fallthru
      _
    // Predicated region
    $region18: #{tpu_custom_call.1} parent=1 // pred_check
      _
    $region19: #{tpu_custom_call.1} parent=1 // pred_check_branch
      %43 = sbr.rel (0) target = $region21
    $region20: #{tpu_custom_call.1} parent=1 // pred_region
      %s45 = ssub.s32 2560, 2560
      %46 = vsyncadd [#allocation6], %s45
      %s47 = sshll.u32 [#allocation7], 4
      %s48 = int_to_ptr.vmem [resolvable:$true] %s47
      %53 = dma.hbm_to_vmem [thread:$0]  %s4, 2560, %s48, [#allocation6], 128, 128, 8
    $region21: #{tpu_custom_call.1} parent=1 // pred_fallthru
      _
    // Predicated region
    $region22: #{tpu_custom_call.1} parent=1 // pred_check
      _
    $region23: #{tpu_custom_call.1} parent=1 // pred_check_branch
      %55 = sbr.rel (0) target = $region25
    $region24: #{tpu_custom_call.1} parent=1 // pred_region
      _
    $region25: #{tpu_custom_call.1} parent=1 // pred_fallthru
      _
    // Predicated region
    $region26: #{tpu_custom_call.1} parent=1 // pred_check
      _
    $region27: #{tpu_custom_call.1} parent=1 // pred_check_branch
      %57 = sbr.rel (0) target = $region29
    $region28: #{tpu_custom_call.1} parent=1 // pred_region
      _
    $region29: #{tpu_custom_call.1} parent=1 // pred_fallthru
      _
    // Predicated region
    $region30: #{tpu_custom_call.1} parent=1 // pred_check
      _
    $region31: #{tpu_custom_call.1} parent=1 // pred_check_branch
      %59 = sbr.rel (0) target = $region33
    $region32: #{tpu_custom_call.1} parent=1 // pred_region
      %60 = dma.done [#allocation4], 2048
    $region33: #{tpu_custom_call.1} parent=1 // pred_fallthru
      _
    // Predicated region
    $region34: #{tpu_custom_call.1} parent=1 // pred_check
      _
    $region35: #{tpu_custom_call.1} parent=1 // pred_check_branch
      %62 = sbr.rel (0) target = $region37
    $region36: #{tpu_custom_call.1} parent=1 // pred_region
      %63 = dma.done [#allocation6], 2560
    $region37: #{tpu_custom_call.1} parent=1 // pred_fallthru
      _
    // Predicated region
    $region38: #{tpu_custom_call.1} parent=1 // pred_check
      _
    $region39: #{tpu_custom_call.1} parent=1 // pred_check_branch
      %65 = sbr.rel (0) target = $region41
    $region40: #{tpu_custom_call.1} parent=1 // pred_region
      %66 = dma.done [#allocation6], 2560
    $region41: #{tpu_custom_call.1} parent=1 // pred_fallthru
      _
    %vm67 = vcmask 261120
    %68 = vst.msk [vmem:[#allocation2] sm:$0xff] %vm67, 0.0
    %vm69 = vcmask 254976
    %70 = vst.msk [vmem:[#allocation2 + $0x8] sm:$0x3] %vm69, 0.0
    %71 = vst.msk [vmem:[#allocation2 + $0x10] sm:$0xff] %vm67, 0.0
    %72 = vst.msk [vmem:[#allocation2 + $0x18] sm:$0x3] %vm69, 0.0
    %s73 = scalar_lea.vmem [#allocation2], 288
    %74 = vst.msk [vmem:[%s73] sm:$0xff] %vm67, 0.0
    %75 = vst.msk [vmem:[%s73 + $0x8] sm:$0x3] %vm69, 0.0
    %76 = vst.msk [vmem:[%s73 + $0x10] sm:$0xff] %vm67, 0.0
    %77 = vst.msk [vmem:[%s73 + $0x18] sm:$0x3] %vm69, 0.0
    %s78 = scalar_lea.vmem [#allocation2], 32
    %vm79 = vcmask 253952
    %80 = vst.msk [vmem:[%s78] sm:$0x1] %vm79, 0.0
    %81 = vst.msk [vmem:[%s78 + $0x10] sm:$0x1] %vm79, 0.0
    %82 = vst.msk [vmem:[%s78 + $0x20] sm:$0x1] %vm79, 0.0
    %83 = vst.msk [vmem:[%s78 + $0x30] sm:$0x1] %vm79, 0.0
    %84 = vst.msk [vmem:[%s78 + $0x40] sm:$0x1] %vm79, 0.0
    %85 = vst.msk [vmem:[%s78 + $0x50] sm:$0x1] %vm79, 0.0
    %86 = vst.msk [vmem:[%s78 + $0x60] sm:$0x1] %vm79, 0.0
    %87 = vst.msk [vmem:[%s78 + $0x70] sm:$0x1] %vm79, 0.0
    %88 = vst.msk [vmem:[%s78 + $0x80] sm:$0x1] %vm79, 0.0
    %89 = vst.msk [vmem:[%s78 + $0x90] sm:$0x1] %vm79, 0.0
    %90 = vst.msk [vmem:[%s78 + $0xa0] sm:$0x1] %vm79, 0.0
    %91 = vst.msk [vmem:[%s78 + $0xb0] sm:$0x1] %vm79, 0.0
    %92 = vst.msk [vmem:[%s78 + $0xc0] sm:$0x1] %vm79, 0.0
    %93 = vst.msk [vmem:[%s78 + $0xd0] sm:$0x1] %vm79, 0.0
    %94 = vst.msk [vmem:[%s78 + $0xe0] sm:$0x1] %vm79, 0.0
    %95 = vst.msk [vmem:[%s78 + $0xf0] sm:$0x1] %vm79, 0.0
    %96 = vst.msk [vmem:[%s78 + $0x9] sm:$0x1] %vm79, 0.0
    %97 = vst.msk [vmem:[%s78 + $0x19] sm:$0x1] %vm79, 0.0
    %98 = vst.msk [vmem:[%s78 + $0x29] sm:$0x1] %vm79, 0.0
    %99 = vst.msk [vmem:[%s78 + $0x39] sm:$0x1] %vm79, 0.0
    %100 = vst.msk [vmem:[%s78 + $0x49] sm:$0x1] %vm79, 0.0
    %101 = vst.msk [vmem:[%s78 + $0x59] sm:$0x1] %vm79, 0.0
    %102 = vst.msk [vmem:[%s78 + $0x69] sm:$0x1] %vm79, 0.0
    %103 = vst.msk [vmem:[%s78 + $0x79] sm:$0x1] %vm79, 0.0
    %104 = vst.msk [vmem:[%s78 + $0x89] sm:$0x1] %vm79, 0.0
    %105 = vst.msk [vmem:[%s78 + $0x99] sm:$0x1] %vm79, 0.0
    %106 = vst.msk [vmem:[%s78 + $0xa9] sm:$0x1] %vm79, 0.0
    %107 = vst.msk [vmem:[%s78 + $0xb9] sm:$0x1] %vm79, 0.0
    %108 = vst.msk [vmem:[%s78 + $0xc9] sm:$0x1] %vm79, 0.0
    %109 = vst.msk [vmem:[%s78 + $0xd9] sm:$0x1] %vm79, 0.0
    %110 = vst.msk [vmem:[%s78 + $0xe9] sm:$0x1] %vm79, 0.0
    %111 = vst.msk [vmem:[%s78 + $0xf9] sm:$0x1] %vm79, 0.0
    %v112 = vld [vmem:[#allocation3] sm:$0xff]
    %v113 = vld [vmem:[#allocation3 + $0x8] sm:$0xff]
    %v114 = vld [vmem:[#allocation3 + $0x10] sm:$0xff]
    %v115 = vld [vmem:[#allocation3 + $0x18] sm:$0xff]
    %v116 = vld [vmem:[#allocation3 + $0x20] sm:$0xff]
    %v117 = vld [vmem:[#allocation3 + $0x28] sm:$0xff]
    %v118 = vld [vmem:[#allocation3 + $0x30] sm:$0xff]
    %v119 = vld [vmem:[#allocation3 + $0x38] sm:$0xff]
    %v120 = vld [vmem:[#allocation3 + $0x40] sm:$0xff]
    %v121 = vld [vmem:[#allocation3 + $0x48] sm:$0xff]
    %v122 = vld [vmem:[#allocation3 + $0x50] sm:$0xff]
    %v123 = vld [vmem:[#allocation3 + $0x58] sm:$0xff]
    %v124 = vld [vmem:[#allocation3 + $0x60] sm:$0xff]
    %v125 = vld [vmem:[#allocation3 + $0x68] sm:$0xff]
    %v126 = vld [vmem:[#allocation3 + $0x70] sm:$0xff]
    %v127 = vld [vmem:[#allocation3 + $0x78] sm:$0xff]
    %128 = vst.msk [vmem:[%s78 + $0x1] sm:$0xff] %vm67, %v112
    %129 = vst.msk [vmem:[%s78 + $0x11] sm:$0xff] %vm67, %v113
    %130 = vst.msk [vmem:[%s78 + $0x21] sm:$0xff] %vm67, %v114
    %131 = vst.msk [vmem:[%s78 + $0x31] sm:$0xff] %vm67, %v115
    %132 = vst.msk [vmem:[%s78 + $0x41] sm:$0xff] %vm67, %v116
    %133 = vst.msk [vmem:[%s78 + $0x51] sm:$0xff] %vm67, %v117
    %134 = vst.msk [vmem:[%s78 + $0x61] sm:$0xff] %vm67, %v118
    %135 = vst.msk [vmem:[%s78 + $0x71] sm:$0xff] %vm67, %v119
    %136 = vst.msk [vmem:[%s78 + $0x81] sm:$0xff] %vm67, %v120
    %137 = vst.msk [vmem:[%s78 + $0x91] sm:$0xff] %vm67, %v121
    %138 = vst.msk [vmem:[%s78 + $0xa1] sm:$0xff] %vm67, %v122
    %139 = vst.msk [vmem:[%s78 + $0xb1] sm:$0xff] %vm67, %v123
    %140 = vst.msk [vmem:[%s78 + $0xc1] sm:$0xff] %vm67, %v124
    %141 = vst.msk [vmem:[%s78 + $0xd1] sm:$0xff] %vm67, %v125
    %142 = vst.msk [vmem:[%s78 + $0xe1] sm:$0xff] %vm67, %v126
    %143 = vst.msk [vmem:[%s78 + $0xf1] sm:$0xff] %vm67, %v127
    %v144 = vld [vmem:[#allocation2] sm:$0xff]
    %v145 = vld [vmem:[#allocation2 + $0x10] sm:$0xff]
    %v146 = vld [vmem:[#allocation2 + $0x20] sm:$0xff]
    %v147 = vld [vmem:[#allocation2 + $0x30] sm:$0xff]
    %v148 = vld [vmem:[#allocation2 + $0x40] sm:$0xff]
    %v149 = vld [vmem:[#allocation2 + $0x50] sm:$0xff]
    %v150 = vld [vmem:[#allocation2 + $0x60] sm:$0xff]
    %v151 = vld [vmem:[#allocation2 + $0x70] sm:$0xff]
    %v152 = vld [vmem:[#allocation2 + $0x80] sm:$0xff]
    %v153 = vld [vmem:[#allocation2 + $0x90] sm:$0xff]
    %v154 = vld [vmem:[#allocation2 + $0xa0] sm:$0xff]
    %v155 = vld [vmem:[#allocation2 + $0xb0] sm:$0xff]
    %v156 = vld [vmem:[#allocation2 + $0xc0] sm:$0xff]
    %v157 = vld [vmem:[#allocation2 + $0xd0] sm:$0xff]
    %v158 = vld [vmem:[#allocation2 + $0xe0] sm:$0xff]
    %v159 = vld [vmem:[#allocation2 + $0xf0] sm:$0xff]
    %v160 = vld [vmem:[#allocation5] sm:$0xff]
    %v161 = vld [vmem:[#allocation5 + $0x8] sm:$0xff]
    %v162 = vld [vmem:[#allocation5 + $0x10] sm:$0xff]
    %v163 = vld [vmem:[#allocation5 + $0x18] sm:$0xff]
    %v164 = vld [vmem:[%s78] sm:$0xff]
    %v165 = vld [vmem:[%s78 + $0x10] sm:$0xff]
    %v166 = vld [vmem:[%s78 + $0x20] sm:$0xff]
    %v167 = vld [vmem:[%s78 + $0x30] sm:$0xff]
    %v168 = vld [vmem:[%s78 + $0x40] sm:$0xff]
    %v169 = vld [vmem:[%s78 + $0x50] sm:$0xff]
    %v170 = vld [vmem:[%s78 + $0x60] sm:$0xff]
    %v171 = vld [vmem:[%s78 + $0x70] sm:$0xff]
    %v172 = vld [vmem:[%s78 + $0x80] sm:$0xff]
    %v173 = vld [vmem:[%s78 + $0x90] sm:$0xff]
    %v174 = vld [vmem:[%s78 + $0xa0] sm:$0xff]
    %v175 = vld [vmem:[%s78 + $0xb0] sm:$0xff]
    %v176 = vld [vmem:[%s78 + $0xc0] sm:$0xff]
    %v177 = vld [vmem:[%s78 + $0xd0] sm:$0xff]
    %v178 = vld [vmem:[%s78 + $0xe0] sm:$0xff]
    %v179 = vld [vmem:[%s78 + $0xf0] sm:$0xff]
    %s180 = scalar_lea.vmem [#allocation5], 32
    %v181 = vld [vmem:[%s180] sm:$0xff]
    %v182 = vld [vmem:[%s180 + $0x8] sm:$0xff]
    %v183 = vld [vmem:[%s180 + $0x10] sm:$0xff]
    %v184 = vld [vmem:[%s180 + $0x18] sm:$0xff]
    %v186 = vsel %vm67, %v164, 0
    %v189 = vsel %vm67, %v165, 0
    %v192 = vsel %vm67, %v166, 0
    %v195 = vsel %vm67, %v167, 0
    %v198 = vsel %vm67, %v168, 0
    %v201 = vsel %vm67, %v169, 0
    %v204 = vsel %vm67, %v170, 0
    %v207 = vsel %vm67, %v171, 0
    %v210 = vsel %vm67, %v172, 0
    %v213 = vsel %vm67, %v173, 0
    %v216 = vsel %vm67, %v174, 0
    %v219 = vsel %vm67, %v175, 0
    %v222 = vsel %vm67, %v176, 0
    %v225 = vsel %vm67, %v177, 0
    %v228 = vsel %vm67, %v178, 0
    %v231 = vsel %vm67, %v179, 0
    %233 = vmatprep.subr.mxu0 0.0
    %234 = vmatpush1.msra.mxu0 %v181
    %235 = vmatprep.subr.mxu0 0.0
    %236 = vmatpush1.msra.mxu0 %v182
    %237 = vmatprep.subr.mxu0 0.0
    %238 = vmatpush1.msra.mxu0 %v183
    %239 = vmatprep.subr.mxu0 0.0
    %240 = vmatpush1.msra.mxu0 %v184
    %241 = vmatprep.subr.mxu0 0.0
    %242 = vmatpush1.msra.mxu0 0.0
    %243 = vmatprep.subr.mxu0 0.0
    %244 = vmatpush1.msra.mxu0 0.0
    %245 = vmatprep.subr.mxu0 0.0
    %246 = vmatpush1.msra.mxu0 0.0
    %247 = vmatprep.subr.mxu0 0.0
    %248 = vmatpush1.msra.mxu0 0.0
    %249 = vmatprep.subr.mxu0 0.0
    %250 = vmatpush1.msra.mxu0 0.0
    %251 = vmatprep.subr.mxu0 0.0
    %252 = vmatpush1.msra.mxu0 0.0
    %253 = vmatprep.subr.mxu0 0.0
    %254 = vmatpush1.msra.mxu0 0.0
    %255 = vmatprep.subr.mxu0 0.0
    %256 = vmatpush1.msra.mxu0 0.0
    %257 = vmatprep.subr.mxu0 0.0
    %258 = vmatpush1.msra.mxu0 0.0
    %259 = vmatprep.subr.mxu0 0.0
    %260 = vmatpush1.msra.mxu0 0.0
    %261 = vmatprep.subr.mxu0 0.0
    %262 = vmatpush1.msra.mxu0 0.0
    %263 = vmatprep.subr.mxu0 0.0
    %264 = vmatpush1.msra.mxu0 0.0
    %265 = vmatprep.subr.mxu0 0.0
    %266 = vmatpush1.msra.mxu0 0.0
    %267 = vmatprep.subr.mxu0 0.0
    %268 = vmatpush1.msra.mxu0 0.0
    %269 = vmatprep.subr.mxu0 0.0
    %270 = vmatpush1.msra.mxu0 0.0
    %271 = vmatprep.subr.mxu0 0.0
    %272 = vmatpush1.msra.mxu0 0.0
    %273 = vmatprep.subr.mxu0 0.0
    %274 = vmatpush1.msra.mxu0 0.0
    %275 = vmatprep.subr.mxu0 0.0
    %276 = vmatpush1.msra.mxu0 0.0
    %277 = vmatprep.subr.mxu0 0.0
    %278 = vmatpush1.msra.mxu0 0.0
    %279 = vmatprep.subr.mxu0 0.0
    %280 = vmatpush1.msra.mxu0 0.0
    %281 = vmatprep.subr.mxu0 0.0
    %282 = vmatpush1.msra.mxu0 0.0
    %283 = vmatprep.subr.mxu0 0.0
    %284 = vmatpush1.msra.mxu0 0.0
    %285 = vmatprep.subr.mxu0 0.0
    %286 = vmatpush1.msra.mxu0 0.0
    %287 = vmatprep.subr.mxu0 0.0
    %288 = vmatpush1.msra.mxu0 0.0
    %289 = vmatprep.subr.mxu0 0.0
    %290 = vmatpush1.msra.mxu0 0.0
    %291 = vmatprep.subr.mxu0 0.0
    %292 = vmatpush1.msra.mxu0 0.0
    %293 = vmatprep.subr.mxu0 0.0
    %294 = vmatpush1.msra.mxu0 0.0
    %295 = vmatprep.subr.mxu0 0.0
    %296 = vmatpush1.msra.mxu0 0.0
    %297 = vmatprep.mubr.f32.mxu0 0.0
    %298 = vmatmul.mubr.f32.gmra.mrb[0].mxu0 %v186
    %v299 = vpop.f32.mrb[0].mxu0
    %v300 = vadd.f32 0.0, %v299
    %v301 = vpop.f32.mrb[0].mxu0
    %302 = vmatprep.mubr.f32.mxu0 0.0
    %303 = vmatmul.mubr.f32.gmra.mrb[0].mxu0 %v189
    %v304 = vpop.f32.mrb[0].mxu0
    %v305 = vadd.f32 0.0, %v304
    %v306 = vpop.f32.mrb[0].mxu0
    %307 = vmatprep.mubr.f32.mxu0 0.0
    %308 = vmatmul.mubr.f32.gmra.mrb[0].mxu0 %v192
    %v309 = vpop.f32.mrb[0].mxu0
    %v310 = vadd.f32 0.0, %v309
    %v311 = vpop.f32.mrb[0].mxu0
    %312 = vmatprep.mubr.f32.mxu0 0.0
    %313 = vmatmul.mubr.f32.gmra.mrb[0].mxu0 %v195
    %v314 = vpop.f32.mrb[0].mxu0
    %v315 = vadd.f32 0.0, %v314
    %v316 = vpop.f32.mrb[0].mxu0
    %317 = vmatprep.mubr.f32.mxu0 0.0
    %318 = vmatmul.mubr.f32.gmra.mrb[0].mxu0 %v198
    %v319 = vpop.f32.mrb[0].mxu0
    %v320 = vadd.f32 0.0, %v319
    %v321 = vpop.f32.mrb[0].mxu0
    %322 = vmatprep.mubr.f32.mxu0 0.0
    %323 = vmatmul.mubr.f32.gmra.mrb[0].mxu0 %v201
    %v324 = vpop.f32.mrb[0].mxu0
    %v325 = vadd.f32 0.0, %v324
    %v326 = vpop.f32.mrb[0].mxu0
    %327 = vmatprep.mubr.f32.mxu0 0.0
    %328 = vmatmul.mubr.f32.gmra.mrb[0].mxu0 %v204
    %v329 = vpop.f32.mrb[0].mxu0
    %v330 = vadd.f32 0.0, %v329
    %v331 = vpop.f32.mrb[0].mxu0
    %332 = vmatprep.mubr.f32.mxu0 0.0
    %333 = vmatmul.mubr.f32.gmra.mrb[0].mxu0 %v207
    %v334 = vpop.f32.mrb[0].mxu0
    %v335 = vadd.f32 0.0, %v334
    %v336 = vpop.f32.mrb[0].mxu0
    %337 = vmatprep.mubr.f32.mxu0 0.0
    %338 = vmatmul.mubr.f32.gmra.mrb[0].mxu0 %v210
    %v339 = vpop.f32.mrb[0].mxu0
    %v340 = vadd.f32 0.0, %v339
    %v341 = vpop.f32.mrb[0].mxu0
    %342 = vmatprep.mubr.f32.mxu0 0.0
    %343 = vmatmul.mubr.f32.gmra.mrb[0].mxu0 %v213
    %v344 = vpop.f32.mrb[0].mxu0
    %v345 = vadd.f32 0.0, %v344
    %v346 = vpop.f32.mrb[0].mxu0
    %347 = vmatprep.mubr.f32.mxu0 0.0
    %348 = vmatmul.mubr.f32.gmra.mrb[0].mxu0 %v216
    %v349 = vpop.f32.mrb[0].mxu0
    %v350 = vadd.f32 0.0, %v349
    %v351 = vpop.f32.mrb[0].mxu0
    %352 = vmatprep.mubr.f32.mxu0 0.0
    %353 = vmatmul.mubr.f32.gmra.mrb[0].mxu0 %v219
    %v354 = vpop.f32.mrb[0].mxu0
    %v355 = vadd.f32 0.0, %v354
    %v356 = vpop.f32.mrb[0].mxu0
    %357 = vmatprep.mubr.f32.mxu0 0.0
    %358 = vmatmul.mubr.f32.gmra.mrb[0].mxu0 %v222
    %v359 = vpop.f32.mrb[0].mxu0
    %v360 = vadd.f32 0.0, %v359
    %v361 = vpop.f32.mrb[0].mxu0
    %362 = vmatprep.mubr.f32.mxu0 0.0
    %363 = vmatmul.mubr.f32.gmra.mrb[0].mxu0 %v225
    %v364 = vpop.f32.mrb[0].mxu0
    %v365 = vadd.f32 0.0, %v364
    %v366 = vpop.f32.mrb[0].mxu0
    %367 = vmatprep.mubr.f32.mxu0 0.0
    %368 = vmatmul.mubr.f32.gmra.mrb[0].mxu0 %v228
    %v369 = vpop.f32.mrb[0].mxu0
    %v370 = vadd.f32 0.0, %v369
    %v371 = vpop.f32.mrb[0].mxu0
    %372 = vmatprep.mubr.f32.mxu0 0.0
    %373 = vmatmul.mubr.f32.gmra.mrb[0].mxu0 %v231
    %v374 = vpop.f32.mrb[0].mxu0
    %v375 = vadd.f32 0.0, %v374
    %v376 = vpop.f32.mrb[0].mxu0
    %377 = vdwg.mxu0
    %v379 = vsel %vm67, %v144, 0
    %v382 = vsel %vm67, %v145, 0
    %v385 = vsel %vm67, %v146, 0
    %v388 = vsel %vm67, %v147, 0
    %v391 = vsel %vm67, %v148, 0
    %v394 = vsel %vm67, %v149, 0
    %v397 = vsel %vm67, %v150, 0
    %v400 = vsel %vm67, %v151, 0
    %v403 = vsel %vm67, %v152, 0
    %v406 = vsel %vm67, %v153, 0
    %v409 = vsel %vm67, %v154, 0
    %v412 = vsel %vm67, %v155, 0
    %v415 = vsel %vm67, %v156, 0
    %v418 = vsel %vm67, %v157, 0
    %v421 = vsel %vm67, %v158, 0
    %v424 = vsel %vm67, %v159, 0
    %426 = vmatprep.subr.mxu0 0.0
    %427 = vmatpush1.msra.mxu0 %v160
    %428 = vmatprep.subr.mxu0 0.0
    %429 = vmatpush1.msra.mxu0 %v161
    %430 = vmatprep.subr.mxu0 0.0
    %431 = vmatpush1.msra.mxu0 %v162
    %432 = vmatprep.subr.mxu0 0.0
    %433 = vmatpush1.msra.mxu0 %v163
    %434 = vmatprep.subr.mxu0 0.0
    %435 = vmatpush1.msra.mxu0 0.0
    %436 = vmatprep.subr.mxu0 0.0
    %437 = vmatpush1.msra.mxu0 0.0
    %438 = vmatprep.subr.mxu0 0.0
    %439 = vmatpush1.msra.mxu0 0.0
    %440 = vmatprep.subr.mxu0 0.0
    %441 = vmatpush1.msra.mxu0 0.0
    %442 = vmatprep.subr.mxu0 0.0
    %443 = vmatpush1.msra.mxu0 0.0
    %444 = vmatprep.subr.mxu0 0.0
    %445 = vmatpush1.msra.mxu0 0.0
    %446 = vmatprep.subr.mxu0 0.0
    %447 = vmatpush1.msra.mxu0 0.0
    %448 = vmatprep.subr.mxu0 0.0
    %449 = vmatpush1.msra.mxu0 0.0
    %450 = vmatprep.subr.mxu0 0.0
    %451 = vmatpush1.msra.mxu0 0.0
    %452 = vmatprep.subr.mxu0 0.0
    %453 = vmatpush1.msra.mxu0 0.0
    %454 = vmatprep.subr.mxu0 0.0
    %455 = vmatpush1.msra.mxu0 0.0
    %456 = vmatprep.subr.mxu0 0.0
    %457 = vmatpush1.msra.mxu0 0.0
    %458 = vmatprep.subr.mxu0 0.0
    %459 = vmatpush1.msra.mxu0 0.0
    %460 = vmatprep.subr.mxu0 0.0
    %461 = vmatpush1.msra.mxu0 0.0
    %462 = vmatprep.subr.mxu0 0.0
    %463 = vmatpush1.msra.mxu0 0.0
    %464 = vmatprep.subr.mxu0 0.0
    %465 = vmatpush1.msra.mxu0 0.0
    %466 = vmatprep.subr.mxu0 0.0
    %467 = vmatpush1.msra.mxu0 0.0
    %468 = vmatprep.subr.mxu0 0.0
    %469 = vmatpush1.msra.mxu0 0.0
    %470 = vmatprep.subr.mxu0 0.0
    %471 = vmatpush1.msra.mxu0 0.0
    %472 = vmatprep.subr.mxu0 0.0
    %473 = vmatpush1.msra.mxu0 0.0
    %474 = vmatprep.subr.mxu0 0.0
    %475 = vmatpush1.msra.mxu0 0.0
    %476 = vmatprep.subr.mxu0 0.0
    %477 = vmatpush1.msra.mxu0 0.0
    %478 = vmatprep.subr.mxu0 0.0
    %479 = vmatpush1.msra.mxu0 0.0
    %480 = vmatprep.subr.mxu0 0.0
    %481 = vmatpush1.msra.mxu0 0.0
    %482 = vmatprep.subr.mxu0 0.0
    %483 = vmatpush1.msra.mxu0 0.0
    %484 = vmatprep.subr.mxu0 0.0
    %485 = vmatpush1.msra.mxu0 0.0
    %486 = vmatprep.subr.mxu0 0.0
    %487 = vmatpush1.msra.mxu0 0.0
    %488 = vmatprep.subr.mxu0 0.0
    %489 = vmatpush1.msra.mxu0 0.0
    %490 = vmatprep.mubr.f32.mxu0 0.0
    %491 = vmatmul.mubr.f32.gmra.mrb[0].mxu0 %v379
    %v492 = vpop.f32.mrb[0].mxu0
    %v493 = vadd.f32 %v300, %v492
    %v494 = vpop.f32.mrb[0].mxu0
    %495 = vmatprep.mubr.f32.mxu0 0.0
    %496 = vmatmul.mubr.f32.gmra.mrb[0].mxu0 %v382
    %v497 = vpop.f32.mrb[0].mxu0
    %v498 = vadd.f32 %v305, %v497
    %v499 = vpop.f32.mrb[0].mxu0
    %500 = vmatprep.mubr.f32.mxu0 0.0
    %501 = vmatmul.mubr.f32.gmra.mrb[0].mxu0 %v385
    %v502 = vpop.f32.mrb[0].mxu0
    %v503 = vadd.f32 %v310, %v502
    %v504 = vpop.f32.mrb[0].mxu0
    %505 = vmatprep.mubr.f32.mxu0 0.0
    %506 = vmatmul.mubr.f32.gmra.mrb[0].mxu0 %v388
    %v507 = vpop.f32.mrb[0].mxu0
    %v508 = vadd.f32 %v315, %v507
    %v509 = vpop.f32.mrb[0].mxu0
    %510 = vmatprep.mubr.f32.mxu0 0.0
    %511 = vmatmul.mubr.f32.gmra.mrb[0].mxu0 %v391
    %v512 = vpop.f32.mrb[0].mxu0
    %v513 = vadd.f32 %v320, %v512
    %v514 = vpop.f32.mrb[0].mxu0
    %515 = vmatprep.mubr.f32.mxu0 0.0
    %516 = vmatmul.mubr.f32.gmra.mrb[0].mxu0 %v394
    %v517 = vpop.f32.mrb[0].mxu0
    %v518 = vadd.f32 %v325, %v517
    %v519 = vpop.f32.mrb[0].mxu0
    %520 = vmatprep.mubr.f32.mxu0 0.0
    %521 = vmatmul.mubr.f32.gmra.mrb[0].mxu0 %v397
    %v522 = vpop.f32.mrb[0].mxu0
    %v523 = vadd.f32 %v330, %v522
    %v524 = vpop.f32.mrb[0].mxu0
    %525 = vmatprep.mubr.f32.mxu0 0.0
    %526 = vmatmul.mubr.f32.gmra.mrb[0].mxu0 %v400
    %v527 = vpop.f32.mrb[0].mxu0
    %v528 = vadd.f32 %v335, %v527
    %v529 = vpop.f32.mrb[0].mxu0
    %530 = vmatprep.mubr.f32.mxu0 0.0
    %531 = vmatmul.mubr.f32.gmra.mrb[0].mxu0 %v403
    %v532 = vpop.f32.mrb[0].mxu0
    %v533 = vadd.f32 %v340, %v532
    %v534 = vpop.f32.mrb[0].mxu0
    %535 = vmatprep.mubr.f32.mxu0 0.0
    %536 = vmatmul.mubr.f32.gmra.mrb[0].mxu0 %v406
    %v537 = vpop.f32.mrb[0].mxu0
    %v538 = vadd.f32 %v345, %v537
    %v539 = vpop.f32.mrb[0].mxu0
    %540 = vmatprep.mubr.f32.mxu0 0.0
    %541 = vmatmul.mubr.f32.gmra.mrb[0].mxu0 %v409
    %v542 = vpop.f32.mrb[0].mxu0
    %v543 = vadd.f32 %v350, %v542
    %v544 = vpop.f32.mrb[0].mxu0
    %545 = vmatprep.mubr.f32.mxu0 0.0
    %546 = vmatmul.mubr.f32.gmra.mrb[0].mxu0 %v412
    %v547 = vpop.f32.mrb[0].mxu0
    %v548 = vadd.f32 %v355, %v547
    %v549 = vpop.f32.mrb[0].mxu0
    %550 = vmatprep.mubr.f32.mxu0 0.0
    %551 = vmatmul.mubr.f32.gmra.mrb[0].mxu0 %v415
    %v552 = vpop.f32.mrb[0].mxu0
    %v553 = vadd.f32 %v360, %v552
    %v554 = vpop.f32.mrb[0].mxu0
    %555 = vmatprep.mubr.f32.mxu0 0.0
    %556 = vmatmul.mubr.f32.gmra.mrb[0].mxu0 %v418
    %v557 = vpop.f32.mrb[0].mxu0
    %v558 = vadd.f32 %v365, %v557
    %v559 = vpop.f32.mrb[0].mxu0
    %560 = vmatprep.mubr.f32.mxu0 0.0
    %561 = vmatmul.mubr.f32.gmra.mrb[0].mxu0 %v421
    %v562 = vpop.f32.mrb[0].mxu0
    %v563 = vadd.f32 %v370, %v562
    %v564 = vpop.f32.mrb[0].mxu0
    %565 = vmatprep.mubr.f32.mxu0 0.0
    %566 = vmatmul.mubr.f32.gmra.mrb[0].mxu0 %v424
    %v567 = vpop.f32.mrb[0].mxu0
    %v568 = vadd.f32 %v375, %v567
    %v569 = vpop.f32.mrb[0].mxu0
    %570 = vdwg.mxu0
    %s571 = scalar_lea.vmem [#allocation2], 64
    %v572 = vld [vmem:[%s571] sm:$0xff]
    %v573 = vld [vmem:[%s571 + $0x10] sm:$0xff]
    %v574 = vld [vmem:[%s571 + $0x20] sm:$0xff]
    %v575 = vld [vmem:[%s571 + $0x30] sm:$0xff]
    %v576 = vld [vmem:[%s571 + $0x40] sm:$0xff]
    %v577 = vld [vmem:[%s571 + $0x50] sm:$0xff]
    %v578 = vld [vmem:[%s571 + $0x60] sm:$0xff]
    %v579 = vld [vmem:[%s571 + $0x70] sm:$0xff]
    %v580 = vld [vmem:[%s571 + $0x80] sm:$0xff]
    %v581 = vld [vmem:[%s571 + $0x90] sm:$0xff]
    %v582 = vld [vmem:[%s571 + $0xa0] sm:$0xff]
    %v583 = vld [vmem:[%s571 + $0xb0] sm:$0xff]
    %v584 = vld [vmem:[%s571 + $0xc0] sm:$0xff]
    %v585 = vld [vmem:[%s571 + $0xd0] sm:$0xff]
    %v586 = vld [vmem:[%s571 + $0xe0] sm:$0xff]
    %v587 = vld [vmem:[%s571 + $0xf0] sm:$0xff]
    %s588 = scalar_lea.vmem [#allocation5], 64
    %v589 = vld [vmem:[%s588] sm:$0xff]
    %v590 = vld [vmem:[%s588 + $0x8] sm:$0xff]
    %v591 = vld [vmem:[%s588 + $0x10] sm:$0xff]
    %v592 = vld [vmem:[%s588 + $0x18] sm:$0xff]
    %v594 = vsel %vm67, %v572, 0
    %v597 = vsel %vm67, %v573, 0
    %v600 = vsel %vm67, %v574, 0
    %v603 = vsel %vm67, %v575, 0
    %v606 = vsel %vm67, %v576, 0
    %v609 = vsel %vm67, %v577, 0
    %v612 = vsel %vm67, %v578, 0
    %v615 = vsel %vm67, %v579, 0
    %v618 = vsel %vm67, %v580, 0
    %v621 = vsel %vm67, %v581, 0
    %v624 = vsel %vm67, %v582, 0
    %v627 = vsel %vm67, %v583, 0
    %v630 = vsel %vm67, %v584, 0
    %v633 = vsel %vm67, %v585, 0
    %v636 = vsel %vm67, %v586, 0
    %v639 = vsel %vm67, %v587, 0
    %641 = vmatprep.subr.mxu0 0.0
    %642 = vmatpush1.msra.mxu0 %v589
    %643 = vmatprep.subr.mxu0 0.0
    %644 = vmatpush1.msra.mxu0 %v590
    %645 = vmatprep.subr.mxu0 0.0
    %646 = vmatpush1.msra.mxu0 %v591
    %647 = vmatprep.subr.mxu0 0.0
    %648 = vmatpush1.msra.mxu0 %v592
    %649 = vmatprep.subr.mxu0 0.0
    %650 = vmatpush1.msra.mxu0 0.0
    %651 = vmatprep.subr.mxu0 0.0
    %652 = vmatpush1.msra.mxu0 0.0
    %653 = vmatprep.subr.mxu0 0.0
    %654 = vmatpush1.msra.mxu0 0.0
    %655 = vmatprep.subr.mxu0 0.0
    %656 = vmatpush1.msra.mxu0 0.0
    %657 = vmatprep.subr.mxu0 0.0
    %658 = vmatpush1.msra.mxu0 0.0
    %659 = vmatprep.subr.mxu0 0.0
    %660 = vmatpush1.msra.mxu0 0.0
    %661 = vmatprep.subr.mxu0 0.0
    %662 = vmatpush1.msra.mxu0 0.0
    %663 = vmatprep.subr.mxu0 0.0
    %664 = vmatpush1.msra.mxu0 0.0
    %665 = vmatprep.subr.mxu0 0.0
    %666 = vmatpush1.msra.mxu0 0.0
    %667 = vmatprep.subr.mxu0 0.0
    %668 = vmatpush1.msra.mxu0 0.0
    %669 = vmatprep.subr.mxu0 0.0
    %670 = vmatpush1.msra.mxu0 0.0
    %671 = vmatprep.subr.mxu0 0.0
    %672 = vmatpush1.msra.mxu0 0.0
    %673 = vmatprep.subr.mxu0 0.0
    %674 = vmatpush1.msra.mxu0 0.0
    %675 = vmatprep.subr.mxu0 0.0
    %676 = vmatpush1.msra.mxu0 0.0
    %677 = vmatprep.subr.mxu0 0.0
    %678 = vmatpush1.msra.mxu0 0.0
    %679 = vmatprep.subr.mxu0 0.0
    %680 = vmatpush1.msra.mxu0 0.0
    %681 = vmatprep.subr.mxu0 0.0
    %682 = vmatpush1.msra.mxu0 0.0
    %683 = vmatprep.subr.mxu0 0.0
    %684 = vmatpush1.msra.mxu0 0.0
    %685 = vmatprep.subr.mxu0 0.0
    %686 = vmatpush1.msra.mxu0 0.0
    %687 = vmatprep.subr.mxu0 0.0
    %688 = vmatpush1.msra.mxu0 0.0
    %689 = vmatprep.subr.mxu0 0.0
    %690 = vmatpush1.msra.mxu0 0.0
    %691 = vmatprep.subr.mxu0 0.0
    %692 = vmatpush1.msra.mxu0 0.0
    %693 = vmatprep.subr.mxu0 0.0
    %694 = vmatpush1.msra.mxu0 0.0
    %695 = vmatprep.subr.mxu0 0.0
    %696 = vmatpush1.msra.mxu0 0.0
    %697 = vmatprep.subr.mxu0 0.0
    %698 = vmatpush1.msra.mxu0 0.0
    %699 = vmatprep.subr.mxu0 0.0
    %700 = vmatpush1.msra.mxu0 0.0
    %701 = vmatprep.subr.mxu0 0.0
    %702 = vmatpush1.msra.mxu0 0.0
    %703 = vmatprep.subr.mxu0 0.0
    %704 = vmatpush1.msra.mxu0 0.0
    %705 = vmatprep.mubr.f32.mxu0 0.0
    %706 = vmatmul.mubr.f32.gmra.mrb[0].mxu0 %v594
    %v707 = vpop.f32.mrb[0].mxu0
    %v708 = vadd.f32 0.0, %v707
    %v709 = vpop.f32.mrb[0].mxu0
    %710 = vmatprep.mubr.f32.mxu0 0.0
    %711 = vmatmul.mubr.f32.gmra.mrb[0].mxu0 %v597
    %v712 = vpop.f32.mrb[0].mxu0
    %v713 = vadd.f32 0.0, %v712
    %v714 = vpop.f32.mrb[0].mxu0
    %715 = vmatprep.mubr.f32.mxu0 0.0
    %716 = vmatmul.mubr.f32.gmra.mrb[0].mxu0 %v600
    %v717 = vpop.f32.mrb[0].mxu0
    %v718 = vadd.f32 0.0, %v717
    %v719 = vpop.f32.mrb[0].mxu0
    %720 = vmatprep.mubr.f32.mxu0 0.0
    %721 = vmatmul.mubr.f32.gmra.mrb[0].mxu0 %v603
    %v722 = vpop.f32.mrb[0].mxu0
    %v723 = vadd.f32 0.0, %v722
    %v724 = vpop.f32.mrb[0].mxu0
    %725 = vmatprep.mubr.f32.mxu0 0.0
    %726 = vmatmul.mubr.f32.gmra.mrb[0].mxu0 %v606
    %v727 = vpop.f32.mrb[0].mxu0
    %v728 = vadd.f32 0.0, %v727
    %v729 = vpop.f32.mrb[0].mxu0
    %730 = vmatprep.mubr.f32.mxu0 0.0
    %731 = vmatmul.mubr.f32.gmra.mrb[0].mxu0 %v609
    %v732 = vpop.f32.mrb[0].mxu0
    %v733 = vadd.f32 0.0, %v732
    %v734 = vpop.f32.mrb[0].mxu0
    %735 = vmatprep.mubr.f32.mxu0 0.0
    %736 = vmatmul.mubr.f32.gmra.mrb[0].mxu0 %v612
    %v737 = vpop.f32.mrb[0].mxu0
    %v738 = vadd.f32 0.0, %v737
    %v739 = vpop.f32.mrb[0].mxu0
    %740 = vmatprep.mubr.f32.mxu0 0.0
    %741 = vmatmul.mubr.f32.gmra.mrb[0].mxu0 %v615
    %v742 = vpop.f32.mrb[0].mxu0
    %v743 = vadd.f32 0.0, %v742
    %v744 = vpop.f32.mrb[0].mxu0
    %745 = vmatprep.mubr.f32.mxu0 0.0
    %746 = vmatmul.mubr.f32.gmra.mrb[0].mxu0 %v618
    %v747 = vpop.f32.mrb[0].mxu0
    %v748 = vadd.f32 0.0, %v747
    %v749 = vpop.f32.mrb[0].mxu0
    %750 = vmatprep.mubr.f32.mxu0 0.0
    %751 = vmatmul.mubr.f32.gmra.mrb[0].mxu0 %v621
    %v752 = vpop.f32.mrb[0].mxu0
    %v753 = vadd.f32 0.0, %v752
    %v754 = vpop.f32.mrb[0].mxu0
    %755 = vmatprep.mubr.f32.mxu0 0.0
    %756 = vmatmul.mubr.f32.gmra.mrb[0].mxu0 %v624
    %v757 = vpop.f32.mrb[0].mxu0
    %v758 = vadd.f32 0.0, %v757
    %v759 = vpop.f32.mrb[0].mxu0
    %760 = vmatprep.mubr.f32.mxu0 0.0
    %761 = vmatmul.mubr.f32.gmra.mrb[0].mxu0 %v627
    %v762 = vpop.f32.mrb[0].mxu0
    %v763 = vadd.f32 0.0, %v762
    %v764 = vpop.f32.mrb[0].mxu0
    %765 = vmatprep.mubr.f32.mxu0 0.0
    %766 = vmatmul.mubr.f32.gmra.mrb[0].mxu0 %v630
    %v767 = vpop.f32.mrb[0].mxu0
    %v768 = vadd.f32 0.0, %v767
    %v769 = vpop.f32.mrb[0].mxu0
    %770 = vmatprep.mubr.f32.mxu0 0.0
    %771 = vmatmul.mubr.f32.gmra.mrb[0].mxu0 %v633
    %v772 = vpop.f32.mrb[0].mxu0
    %v773 = vadd.f32 0.0, %v772
    %v774 = vpop.f32.mrb[0].mxu0
    %775 = vmatprep.mubr.f32.mxu0 0.0
    %776 = vmatmul.mubr.f32.gmra.mrb[0].mxu0 %v636
    %v777 = vpop.f32.mrb[0].mxu0
    %v778 = vadd.f32 0.0, %v777
    %v779 = vpop.f32.mrb[0].mxu0
    %780 = vmatprep.mubr.f32.mxu0 0.0
    %781 = vmatmul.mubr.f32.gmra.mrb[0].mxu0 %v639
    %v782 = vpop.f32.mrb[0].mxu0
    %v783 = vadd.f32 0.0, %v782
    %v784 = vpop.f32.mrb[0].mxu0
    %785 = vdwg.mxu0
    %v786 = vadd.f32 %v493, %v708
    %v787 = vadd.f32 %v498, %v713
    %v788 = vadd.f32 %v503, %v718
    %v789 = vadd.f32 %v508, %v723
    %v790 = vadd.f32 %v513, %v728
    %v791 = vadd.f32 %v518, %v733
    %v792 = vadd.f32 %v523, %v738
    %v793 = vadd.f32 %v528, %v743
    %v794 = vadd.f32 %v533, %v748
    %v795 = vadd.f32 %v538, %v753
    %v796 = vadd.f32 %v543, %v758
    %v797 = vadd.f32 %v548, %v763
    %v798 = vadd.f32 %v553, %v768
    %v799 = vadd.f32 %v558, %v773
    %v800 = vadd.f32 %v563, %v778
    %v801 = vadd.f32 %v568, %v783
    %v802 = vld [vmem:[#allocation2 + $0x1] sm:$0xff]
    %v803 = vld [vmem:[#allocation2 + $0x11] sm:$0xff]
    %v804 = vld [vmem:[#allocation2 + $0x21] sm:$0xff]
    %v805 = vld [vmem:[#allocation2 + $0x31] sm:$0xff]
    %v806 = vld [vmem:[#allocation2 + $0x41] sm:$0xff]
    %v807 = vld [vmem:[#allocation2 + $0x51] sm:$0xff]
    %v808 = vld [vmem:[#allocation2 + $0x61] sm:$0xff]
    %v809 = vld [vmem:[#allocation2 + $0x71] sm:$0xff]
    %v810 = vld [vmem:[#allocation2 + $0x81] sm:$0xff]
    %v811 = vld [vmem:[#allocation2 + $0x91] sm:$0xff]
    %v812 = vld [vmem:[#allocation2 + $0xa1] sm:$0xff]
    %v813 = vld [vmem:[#allocation2 + $0xb1] sm:$0xff]
    %v814 = vld [vmem:[#allocation2 + $0xc1] sm:$0xff]
    %v815 = vld [vmem:[#allocation2 + $0xd1] sm:$0xff]
    %v816 = vld [vmem:[#allocation2 + $0xe1] sm:$0xff]
    %v817 = vld [vmem:[#allocation2 + $0xf1] sm:$0xff]
    %s818 = scalar_lea.vmem [#allocation5], 96
    %v819 = vld [vmem:[%s818] sm:$0xff]
    %v820 = vld [vmem:[%s818 + $0x8] sm:$0xff]
    %v821 = vld [vmem:[%s818 + $0x10] sm:$0xff]
    %v822 = vld [vmem:[%s818 + $0x18] sm:$0xff]
    %v824 = vsel %vm67, %v802, 0
    %v827 = vsel %vm67, %v803, 0
    %v830 = vsel %vm67, %v804, 0
    %v833 = vsel %vm67, %v805, 0
    %v836 = vsel %vm67, %v806, 0
    %v839 = vsel %vm67, %v807, 0
    %v842 = vsel %vm67, %v808, 0
    %v845 = vsel %vm67, %v809, 0
    %v848 = vsel %vm67, %v810, 0
    %v851 = vsel %vm67, %v811, 0
    %v854 = vsel %vm67, %v812, 0
    %v857 = vsel %vm67, %v813, 0
    %v860 = vsel %vm67, %v814, 0
    %v863 = vsel %vm67, %v815, 0
    %v866 = vsel %vm67, %v816, 0
    %v869 = vsel %vm67, %v817, 0
    %871 = vmatprep.subr.mxu0 0.0
    %872 = vmatpush1.msra.mxu0 %v819
    %873 = vmatprep.subr.mxu0 0.0
    %874 = vmatpush1.msra.mxu0 %v820
    %875 = vmatprep.subr.mxu0 0.0
    %876 = vmatpush1.msra.mxu0 %v821
    %877 = vmatprep.subr.mxu0 0.0
    %878 = vmatpush1.msra.mxu0 %v822
    %879 = vmatprep.subr.mxu0 0.0
    %880 = vmatpush1.msra.mxu0 0.0
    %881 = vmatprep.subr.mxu0 0.0
    %882 = vmatpush1.msra.mxu0 0.0
    %883 = vmatprep.subr.mxu0 0.0
    %884 = vmatpush1.msra.mxu0 0.0
    %885 = vmatprep.subr.mxu0 0.0
    %886 = vmatpush1.msra.mxu0 0.0
    %887 = vmatprep.subr.mxu0 0.0
    %888 = vmatpush1.msra.mxu0 0.0
    %889 = vmatprep.subr.mxu0 0.0
    %890 = vmatpush1.msra.mxu0 0.0
    %891 = vmatprep.subr.mxu0 0.0
    %892 = vmatpush1.msra.mxu0 0.0
    %893 = vmatprep.subr.mxu0 0.0
    %894 = vmatpush1.msra.mxu0 0.0
    %895 = vmatprep.subr.mxu0 0.0
    %896 = vmatpush1.msra.mxu0 0.0
    %897 = vmatprep.subr.mxu0 0.0
    %898 = vmatpush1.msra.mxu0 0.0
    %899 = vmatprep.subr.mxu0 0.0
    %900 = vmatpush1.msra.mxu0 0.0
    %901 = vmatprep.subr.mxu0 0.0
    %902 = vmatpush1.msra.mxu0 0.0
    %903 = vmatprep.subr.mxu0 0.0
    %904 = vmatpush1.msra.mxu0 0.0
    %905 = vmatprep.subr.mxu0 0.0
    %906 = vmatpush1.msra.mxu0 0.0
    %907 = vmatprep.subr.mxu0 0.0
    %908 = vmatpush1.msra.mxu0 0.0
    %909 = vmatprep.subr.mxu0 0.0
    %910 = vmatpush1.msra.mxu0 0.0
    %911 = vmatprep.subr.mxu0 0.0
    %912 = vmatpush1.msra.mxu0 0.0
    %913 = vmatprep.subr.mxu0 0.0
    %914 = vmatpush1.msra.mxu0 0.0
    %915 = vmatprep.subr.mxu0 0.0
    %916 = vmatpush1.msra.mxu0 0.0
    %917 = vmatprep.subr.mxu0 0.0
    %918 = vmatpush1.msra.mxu0 0.0
    %919 = vmatprep.subr.mxu0 0.0
    %920 = vmatpush1.msra.mxu0 0.0
    %921 = vmatprep.subr.mxu0 0.0
    %922 = vmatpush1.msra.mxu0 0.0
    %923 = vmatprep.subr.mxu0 0.0
    %924 = vmatpush1.msra.mxu0 0.0
    %925 = vmatprep.subr.mxu0 0.0
    %926 = vmatpush1.msra.mxu0 0.0
    %927 = vmatprep.subr.mxu0 0.0
    %928 = vmatpush1.msra.mxu0 0.0
    %929 = vmatprep.subr.mxu0 0.0
    %930 = vmatpush1.msra.mxu0 0.0
    %931 = vmatprep.subr.mxu0 0.0
    %932 = vmatpush1.msra.mxu0 0.0
    %933 = vmatprep.subr.mxu0 0.0
    %934 = vmatpush1.msra.mxu0 0.0
    %935 = vmatprep.mubr.f32.mxu0 0.0
    %936 = vmatmul.mubr.f32.gmra.mrb[0].mxu0 %v824
    %v937 = vpop.f32.mrb[0].mxu0
    %v938 = vadd.f32 0.0, %v937
    %v939 = vpop.f32.mrb[0].mxu0
    %940 = vmatprep.mubr.f32.mxu0 0.0
    %941 = vmatmul.mubr.f32.gmra.mrb[0].mxu0 %v827
    %v942 = vpop.f32.mrb[0].mxu0
    %v943 = vadd.f32 0.0, %v942
    %v944 = vpop.f32.mrb[0].mxu0
    %945 = vmatprep.mubr.f32.mxu0 0.0
    %946 = vmatmul.mubr.f32.gmra.mrb[0].mxu0 %v830
    %v947 = vpop.f32.mrb[0].mxu0
    %v948 = vadd.f32 0.0, %v947
    %v949 = vpop.f32.mrb[0].mxu0
    %950 = vmatprep.mubr.f32.mxu0 0.0
    %951 = vmatmul.mubr.f32.gmra.mrb[0].mxu0 %v833
    %v952 = vpop.f32.mrb[0].mxu0
    %v953 = vadd.f32 0.0, %v952
    %v954 = vpop.f32.mrb[0].mxu0
    %955 = vmatprep.mubr.f32.mxu0 0.0
    %956 = vmatmul.mubr.f32.gmra.mrb[0].mxu0 %v836
    %v957 = vpop.f32.mrb[0].mxu0
    %v958 = vadd.f32 0.0, %v957
    %v959 = vpop.f32.mrb[0].mxu0
    %960 = vmatprep.mubr.f32.mxu0 0.0
    %961 = vmatmul.mubr.f32.gmra.mrb[0].mxu0 %v839
    %v962 = vpop.f32.mrb[0].mxu0
    %v963 = vadd.f32 0.0, %v962
    %v964 = vpop.f32.mrb[0].mxu0
    %965 = vmatprep.mubr.f32.mxu0 0.0
    %966 = vmatmul.mubr.f32.gmra.mrb[0].mxu0 %v842
    %v967 = vpop.f32.mrb[0].mxu0
    %v968 = vadd.f32 0.0, %v967
    %v969 = vpop.f32.mrb[0].mxu0
    %970 = vmatprep.mubr.f32.mxu0 0.0
    %971 = vmatmul.mubr.f32.gmra.mrb[0].mxu0 %v845
    %v972 = vpop.f32.mrb[0].mxu0
    %v973 = vadd.f32 0.0, %v972
    %v974 = vpop.f32.mrb[0].mxu0
    %975 = vmatprep.mubr.f32.mxu0 0.0
    %976 = vmatmul.mubr.f32.gmra.mrb[0].mxu0 %v848
    %v977 = vpop.f32.mrb[0].mxu0
    %v978 = vadd.f32 0.0, %v977
    %v979 = vpop.f32.mrb[0].mxu0
    %980 = vmatprep.mubr.f32.mxu0 0.0
    %981 = vmatmul.mubr.f32.gmra.mrb[0].mxu0 %v851
    %v982 = vpop.f32.mrb[0].mxu0
    %v983 = vadd.f32 0.0, %v982
    %v984 = vpop.f32.mrb[0].mxu0
    %985 = vmatprep.mubr.f32.mxu0 0.0
    %986 = vmatmul.mubr.f32.gmra.mrb[0].mxu0 %v854
    %v987 = vpop.f32.mrb[0].mxu0
    %v988 = vadd.f32 0.0, %v987
    %v989 = vpop.f32.mrb[0].mxu0
    %990 = vmatprep.mubr.f32.mxu0 0.0
    %991 = vmatmul.mubr.f32.gmra.mrb[0].mxu0 %v857
    %v992 = vpop.f32.mrb[0].mxu0
    %v993 = vadd.f32 0.0, %v992
    %v994 = vpop.f32.mrb[0].mxu0
    %995 = vmatprep.mubr.f32.mxu0 0.0
    %996 = vmatmul.mubr.f32.gmra.mrb[0].mxu0 %v860
    %v997 = vpop.f32.mrb[0].mxu0
    %v998 = vadd.f32 0.0, %v997
    %v999 = vpop.f32.mrb[0].mxu0
    %1000 = vmatprep.mubr.f32.mxu0 0.0
    %1001 = vmatmul.mubr.f32.gmra.mrb[0].mxu0 %v863
    %v1002 = vpop.f32.mrb[0].mxu0
    %v1003 = vadd.f32 0.0, %v1002
    %v1004 = vpop.f32.mrb[0].mxu0
    %1005 = vmatprep.mubr.f32.mxu0 0.0
    %1006 = vmatmul.mubr.f32.gmra.mrb[0].mxu0 %v866
    %v1007 = vpop.f32.mrb[0].mxu0
    %v1008 = vadd.f32 0.0, %v1007
    %v1009 = vpop.f32.mrb[0].mxu0
    %1010 = vmatprep.mubr.f32.mxu0 0.0
    %1011 = vmatmul.mubr.f32.gmra.mrb[0].mxu0 %v869
    %v1012 = vpop.f32.mrb[0].mxu0
    %v1013 = vadd.f32 0.0, %v1012
    %v1014 = vpop.f32.mrb[0].mxu0
    %1015 = vdwg.mxu0
    %v1016 = vadd.f32 %v786, %v938
    %v1017 = vadd.f32 %v787, %v943
    %v1018 = vadd.f32 %v788, %v948
    %v1019 = vadd.f32 %v789, %v953
    %v1020 = vadd.f32 %v790, %v958
    %v1021 = vadd.f32 %v791, %v963
    %v1022 = vadd.f32 %v792, %v968
    %v1023 = vadd.f32 %v793, %v973
    %v1024 = vadd.f32 %v794, %v978
    %v1025 = vadd.f32 %v795, %v983
    %v1026 = vadd.f32 %v796, %v988
    %v1027 = vadd.f32 %v797, %v993
    %v1028 = vadd.f32 %v798, %v998
    %v1029 = vadd.f32 %v799, %v1003
    %v1030 = vadd.f32 %v800, %v1008
    %v1031 = vadd.f32 %v801, %v1013
    %v1032 = vld [vmem:[%s78 + $0x1] sm:$0xff]
    %v1033 = vld [vmem:[%s78 + $0x11] sm:$0xff]
    %v1034 = vld [vmem:[%s78 + $0x21] sm:$0xff]
    %v1035 = vld [vmem:[%s78 + $0x31] sm:$0xff]
    %v1036 = vld [vmem:[%s78 + $0x41] sm:$0xff]
    %v1037 = vld [vmem:[%s78 + $0x51] sm:$0xff]
    %v1038 = vld [vmem:[%s78 + $0x61] sm:$0xff]
    %v1039 = vld [vmem:[%s78 + $0x71] sm:$0xff]
    %v1040 = vld [vmem:[%s78 + $0x81] sm:$0xff]
    %v1041 = vld [vmem:[%s78 + $0x91] sm:$0xff]
    %v1042 = vld [vmem:[%s78 + $0xa1] sm:$0xff]
    %v1043 = vld [vmem:[%s78 + $0xb1] sm:$0xff]
    %v1044 = vld [vmem:[%s78 + $0xc1] sm:$0xff]
    %v1045 = vld [vmem:[%s78 + $0xd1] sm:$0xff]
    %v1046 = vld [vmem:[%s78 + $0xe1] sm:$0xff]
    %v1047 = vld [vmem:[%s78 + $0xf1] sm:$0xff]
    %s1048 = scalar_lea.vmem [#allocation5], 128
    %v1049 = vld [vmem:[%s1048] sm:$0xff]
    %v1050 = vld [vmem:[%s1048 + $0x8] sm:$0xff]
    %v1051 = vld [vmem:[%s1048 + $0x10] sm:$0xff]
    %v1052 = vld [vmem:[%s1048 + $0x18] sm:$0xff]
    %v1054 = vsel %vm67, %v1032, 0
    %v1057 = vsel %vm67, %v1033, 0
    %v1060 = vsel %vm67, %v1034, 0
    %v1063 = vsel %vm67, %v1035, 0
    %v1066 = vsel %vm67, %v1036, 0
    %v1069 = vsel %vm67, %v1037, 0
    %v1072 = vsel %vm67, %v1038, 0
    %v1075 = vsel %vm67, %v1039, 0
    %v1078 = vsel %vm67, %v1040, 0
    %v1081 = vsel %vm67, %v1041, 0
    %v1084 = vsel %vm67, %v1042, 0
    %v1087 = vsel %vm67, %v1043, 0
    %v1090 = vsel %vm67, %v1044, 0
    %v1093 = vsel %vm67, %v1045, 0
    %v1096 = vsel %vm67, %v1046, 0
    %v1099 = vsel %vm67, %v1047, 0
    %1101 = vmatprep.subr.mxu0 0.0
    %1102 = vmatpush1.msra.mxu0 %v1049
    %1103 = vmatprep.subr.mxu0 0.0
    %1104 = vmatpush1.msra.mxu0 %v1050
    %1105 = vmatprep.subr.mxu0 0.0
    %1106 = vmatpush1.msra.mxu0 %v1051
    %1107 = vmatprep.subr.mxu0 0.0
    %1108 = vmatpush1.msra.mxu0 %v1052
    %1109 = vmatprep.subr.mxu0 0.0
    %1110 = vmatpush1.msra.mxu0 0.0
    %1111 = vmatprep.subr.mxu0 0.0
    %1112 = vmatpush1.msra.mxu0 0.0
    %1113 = vmatprep.subr.mxu0 0.0
    %1114 = vmatpush1.msra.mxu0 0.0
    %1115 = vmatprep.subr.mxu0 0.0
    %1116 = vmatpush1.msra.mxu0 0.0
    %1117 = vmatprep.subr.mxu0 0.0
    %1118 = vmatpush1.msra.mxu0 0.0
    %1119 = vmatprep.subr.mxu0 0.0
    %1120 = vmatpush1.msra.mxu0 0.0
    %1121 = vmatprep.subr.mxu0 0.0
    %1122 = vmatpush1.msra.mxu0 0.0
    %1123 = vmatprep.subr.mxu0 0.0
    %1124 = vmatpush1.msra.mxu0 0.0
    %1125 = vmatprep.subr.mxu0 0.0
    %1126 = vmatpush1.msra.mxu0 0.0
    %1127 = vmatprep.subr.mxu0 0.0
    %1128 = vmatpush1.msra.mxu0 0.0
    %1129 = vmatprep.subr.mxu0 0.0
    %1130 = vmatpush1.msra.mxu0 0.0
    %1131 = vmatprep.subr.mxu0 0.0
    %1132 = vmatpush1.msra.mxu0 0.0
    %1133 = vmatprep.subr.mxu0 0.0
    %1134 = vmatpush1.msra.mxu0 0.0
    %1135 = vmatprep.subr.mxu0 0.0
    %1136 = vmatpush1.msra.mxu0 0.0
    %1137 = vmatprep.subr.mxu0 0.0
    %1138 = vmatpush1.msra.mxu0 0.0
    %1139 = vmatprep.subr.mxu0 0.0
    %1140 = vmatpush1.msra.mxu0 0.0
    %1141 = vmatprep.subr.mxu0 0.0
    %1142 = vmatpush1.msra.mxu0 0.0
    %1143 = vmatprep.subr.mxu0 0.0
    %1144 = vmatpush1.msra.mxu0 0.0
    %1145 = vmatprep.subr.mxu0 0.0
    %1146 = vmatpush1.msra.mxu0 0.0
    %1147 = vmatprep.subr.mxu0 0.0
    %1148 = vmatpush1.msra.mxu0 0.0
    %1149 = vmatprep.subr.mxu0 0.0
    %1150 = vmatpush1.msra.mxu0 0.0
    %1151 = vmatprep.subr.mxu0 0.0
    %1152 = vmatpush1.msra.mxu0 0.0
    %1153 = vmatprep.subr.mxu0 0.0
    %1154 = vmatpush1.msra.mxu0 0.0
    %1155 = vmatprep.subr.mxu0 0.0
    %1156 = vmatpush1.msra.mxu0 0.0
    %1157 = vmatprep.subr.mxu0 0.0
    %1158 = vmatpush1.msra.mxu0 0.0
    %1159 = vmatprep.subr.mxu0 0.0
    %1160 = vmatpush1.msra.mxu0 0.0
    %1161 = vmatprep.subr.mxu0 0.0
    %1162 = vmatpush1.msra.mxu0 0.0
    %1163 = vmatprep.subr.mxu0 0.0
    %1164 = vmatpush1.msra.mxu0 0.0
    %1165 = vmatprep.mubr.f32.mxu0 0.0
    %1166 = vmatmul.mubr.f32.gmra.mrb[0].mxu0 %v1054
    %v1167 = vpop.f32.mrb[0].mxu0
    %v1168 = vadd.f32 0.0, %v1167
    %v1169 = vpop.f32.mrb[0].mxu0
    %1170 = vmatprep.mubr.f32.mxu0 0.0
    %1171 = vmatmul.mubr.f32.gmra.mrb[0].mxu0 %v1057
    %v1172 = vpop.f32.mrb[0].mxu0
    %v1173 = vadd.f32 0.0, %v1172
    %v1174 = vpop.f32.mrb[0].mxu0
    %1175 = vmatprep.mubr.f32.mxu0 0.0
    %1176 = vmatmul.mubr.f32.gmra.mrb[0].mxu0 %v1060
    %v1177 = vpop.f32.mrb[0].mxu0
    %v1178 = vadd.f32 0.0, %v1177
    %v1179 = vpop.f32.mrb[0].mxu0
    %1180 = vmatprep.mubr.f32.mxu0 0.0
    %1181 = vmatmul.mubr.f32.gmra.mrb[0].mxu0 %v1063
    %v1182 = vpop.f32.mrb[0].mxu0
    %v1183 = vadd.f32 0.0, %v1182
    %v1184 = vpop.f32.mrb[0].mxu0
    %1185 = vmatprep.mubr.f32.mxu0 0.0
    %1186 = vmatmul.mubr.f32.gmra.mrb[0].mxu0 %v1066
    %v1187 = vpop.f32.mrb[0].mxu0
    %v1188 = vadd.f32 0.0, %v1187
    %v1189 = vpop.f32.mrb[0].mxu0
    %1190 = vmatprep.mubr.f32.mxu0 0.0
    %1191 = vmatmul.mubr.f32.gmra.mrb[0].mxu0 %v1069
    %v1192 = vpop.f32.mrb[0].mxu0
    %v1193 = vadd.f32 0.0, %v1192
    %v1194 = vpop.f32.mrb[0].mxu0
    %1195 = vmatprep.mubr.f32.mxu0 0.0
    %1196 = vmatmul.mubr.f32.gmra.mrb[0].mxu0 %v1072
    %v1197 = vpop.f32.mrb[0].mxu0
    %v1198 = vadd.f32 0.0, %v1197
    %v1199 = vpop.f32.mrb[0].mxu0
    %1200 = vmatprep.mubr.f32.mxu0 0.0
    %1201 = vmatmul.mubr.f32.gmra.mrb[0].mxu0 %v1075
    %v1202 = vpop.f32.mrb[0].mxu0
    %v1203 = vadd.f32 0.0, %v1202
    %v1204 = vpop.f32.mrb[0].mxu0
    %1205 = vmatprep.mubr.f32.mxu0 0.0
    %1206 = vmatmul.mubr.f32.gmra.mrb[0].mxu0 %v1078
    %v1207 = vpop.f32.mrb[0].mxu0
    %v1208 = vadd.f32 0.0, %v1207
    %v1209 = vpop.f32.mrb[0].mxu0
    %1210 = vmatprep.mubr.f32.mxu0 0.0
    %1211 = vmatmul.mubr.f32.gmra.mrb[0].mxu0 %v1081
    %v1212 = vpop.f32.mrb[0].mxu0
    %v1213 = vadd.f32 0.0, %v1212
    %v1214 = vpop.f32.mrb[0].mxu0
    %1215 = vmatprep.mubr.f32.mxu0 0.0
    %1216 = vmatmul.mubr.f32.gmra.mrb[0].mxu0 %v1084
    %v1217 = vpop.f32.mrb[0].mxu0
    %v1218 = vadd.f32 0.0, %v1217
    %v1219 = vpop.f32.mrb[0].mxu0
    %1220 = vmatprep.mubr.f32.mxu0 0.0
    %1221 = vmatmul.mubr.f32.gmra.mrb[0].mxu0 %v1087
    %v1222 = vpop.f32.mrb[0].mxu0
    %v1223 = vadd.f32 0.0, %v1222
    %v1224 = vpop.f32.mrb[0].mxu0
    %1225 = vmatprep.mubr.f32.mxu0 0.0
    %1226 = vmatmul.mubr.f32.gmra.mrb[0].mxu0 %v1090
    %v1227 = vpop.f32.mrb[0].mxu0
    %v1228 = vadd.f32 0.0, %v1227
    %v1229 = vpop.f32.mrb[0].mxu0
    %1230 = vmatprep.mubr.f32.mxu0 0.0
    %1231 = vmatmul.mubr.f32.gmra.mrb[0].mxu0 %v1093
    %v1232 = vpop.f32.mrb[0].mxu0
    %v1233 = vadd.f32 0.0, %v1232
    %v1234 = vpop.f32.mrb[0].mxu0
    %1235 = vmatprep.mubr.f32.mxu0 0.0
    %1236 = vmatmul.mubr.f32.gmra.mrb[0].mxu0 %v1096
    %v1237 = vpop.f32.mrb[0].mxu0
    %v1238 = vadd.f32 0.0, %v1237
    %v1239 = vpop.f32.mrb[0].mxu0
    %1240 = vmatprep.mubr.f32.mxu0 0.0
    %1241 = vmatmul.mubr.f32.gmra.mrb[0].mxu0 %v1099
    %v1242 = vpop.f32.mrb[0].mxu0
    %v1243 = vadd.f32 0.0, %v1242
    %v1244 = vpop.f32.mrb[0].mxu0
    %1245 = vdwg.mxu0
    %v1246 = vadd.f32 %v1016, %v1168
    %v1247 = vadd.f32 %v1017, %v1173
    %v1248 = vadd.f32 %v1018, %v1178
    %v1249 = vadd.f32 %v1019, %v1183
    %v1250 = vadd.f32 %v1020, %v1188
    %v1251 = vadd.f32 %v1021, %v1193
    %v1252 = vadd.f32 %v1022, %v1198
    %v1253 = vadd.f32 %v1023, %v1203
    %v1254 = vadd.f32 %v1024, %v1208
    %v1255 = vadd.f32 %v1025, %v1213
    %v1256 = vadd.f32 %v1026, %v1218
    %v1257 = vadd.f32 %v1027, %v1223
    %v1258 = vadd.f32 %v1028, %v1228
    %v1259 = vadd.f32 %v1029, %v1233
    %v1260 = vadd.f32 %v1030, %v1238
    %v1261 = vadd.f32 %v1031, %v1243
    %v1262 = vmax.f32 %v1246, 0.0
    %v1263 = vmax.f32 %v1247, 0.0
    %v1264 = vmax.f32 %v1248, 0.0
    %v1265 = vmax.f32 %v1249, 0.0
    %v1266 = vmax.f32 %v1250, 0.0
    %v1267 = vmax.f32 %v1251, 0.0
    %v1268 = vmax.f32 %v1252, 0.0
    %v1269 = vmax.f32 %v1253, 0.0
    %v1270 = vmax.f32 %v1254, 0.0
    %v1271 = vmax.f32 %v1255, 0.0
    %v1272 = vmax.f32 %v1256, 0.0
    %v1273 = vmax.f32 %v1257, 0.0
    %v1274 = vmax.f32 %v1258, 0.0
    %v1275 = vmax.f32 %v1259, 0.0
    %v1276 = vmax.f32 %v1260, 0.0
    %v1277 = vmax.f32 %v1261, 0.0
    %v1278 = vsel %vm67, %v1262, 0.0
    %v1279 = vsel %vm67, %v1263, 0.0
    %v1280 = vadd.f32 %v1278, %v1279
    %v1281 = vsel %vm67, %v1264, 0.0
    %v1282 = vadd.f32 %v1280, %v1281
    %v1283 = vsel %vm67, %v1265, 0.0
    %v1284 = vadd.f32 %v1282, %v1283
    %v1285 = vsel %vm67, %v1266, 0.0
    %v1286 = vadd.f32 %v1284, %v1285
    %v1287 = vsel %vm67, %v1267, 0.0
    %v1288 = vadd.f32 %v1286, %v1287
    %v1289 = vsel %vm67, %v1268, 0.0
    %v1290 = vadd.f32 %v1288, %v1289
    %v1291 = vsel %vm67, %v1269, 0.0
    %v1292 = vadd.f32 %v1290, %v1291
    %v1293 = vsel %vm67, %v1270, 0.0
    %v1294 = vadd.f32 %v1292, %v1293
    %v1295 = vsel %vm67, %v1271, 0.0
    %v1296 = vadd.f32 %v1294, %v1295
    %v1297 = vsel %vm67, %v1272, 0.0
    %v1298 = vadd.f32 %v1296, %v1297
    %v1299 = vsel %vm67, %v1273, 0.0
    %v1300 = vadd.f32 %v1298, %v1299
    %v1301 = vsel %vm67, %v1274, 0.0
    %v1302 = vadd.f32 %v1300, %v1301
    %v1303 = vsel %vm67, %v1275, 0.0
    %v1304 = vadd.f32 %v1302, %v1303
    %v1305 = vsel %vm67, %v1276, 0.0
    %v1306 = vadd.f32 %v1304, %v1305
    %v1307 = vsel %vm67, %v1277, 0.0
    %v1308 = vadd.f32 %v1306, %v1307
    %v1309 = vrot.slane %v1308, 4
    %v1310 = vadd.f32 %v1308, %v1309
    %v1311 = vrot.slane %v1310, 2
    %v1312 = vadd.f32 %v1310, %v1311
    %v1313 = vrot.slane %v1312, 1
    %v1314 = vadd.f32 %v1312, %v1313
    %v1315 = vmul.f32 %v1262, %v1262
    %v1316 = vmul.f32 %v1263, %v1263
    %v1317 = vmul.f32 %v1264, %v1264
    %v1318 = vmul.f32 %v1265, %v1265
    %v1319 = vmul.f32 %v1266, %v1266
    %v1320 = vmul.f32 %v1267, %v1267
    %v1321 = vmul.f32 %v1268, %v1268
    %v1322 = vmul.f32 %v1269, %v1269
    %v1323 = vmul.f32 %v1270, %v1270
    %v1324 = vmul.f32 %v1271, %v1271
    %v1325 = vmul.f32 %v1272, %v1272
    %v1326 = vmul.f32 %v1273, %v1273
    %v1327 = vmul.f32 %v1274, %v1274
    %v1328 = vmul.f32 %v1275, %v1275
    %v1329 = vmul.f32 %v1276, %v1276
    %v1330 = vmul.f32 %v1277, %v1277
    %v1331 = vsel %vm67, %v1315, 0.0
    %v1332 = vsel %vm67, %v1316, 0.0
    %v1333 = vadd.f32 %v1331, %v1332
    %v1334 = vsel %vm67, %v1317, 0.0
    %v1335 = vadd.f32 %v1333, %v1334
    %v1336 = vsel %vm67, %v1318, 0.0
    %v1337 = vadd.f32 %v1335, %v1336
    %v1338 = vsel %vm67, %v1319, 0.0
    %v1339 = vadd.f32 %v1337, %v1338
    %v1340 = vsel %vm67, %v1320, 0.0
    %v1341 = vadd.f32 %v1339, %v1340
    %v1342 = vsel %vm67, %v1321, 0.0
    %v1343 = vadd.f32 %v1341, %v1342
    %v1344 = vsel %vm67, %v1322, 0.0
    %v1345 = vadd.f32 %v1343, %v1344
    %v1346 = vsel %vm67, %v1323, 0.0
    %v1347 = vadd.f32 %v1345, %v1346
    %v1348 = vsel %vm67, %v1324, 0.0
    %v1349 = vadd.f32 %v1347, %v1348
    %v1350 = vsel %vm67, %v1325, 0.0
    %v1351 = vadd.f32 %v1349, %v1350
    %v1352 = vsel %vm67, %v1326, 0.0
    %v1353 = vadd.f32 %v1351, %v1352
    %v1354 = vsel %vm67, %v1327, 0.0
    %v1355 = vadd.f32 %v1353, %v1354
    %v1356 = vsel %vm67, %v1328, 0.0
    %v1357 = vadd.f32 %v1355, %v1356
    %v1358 = vsel %vm67, %v1329, 0.0
    %v1359 = vadd.f32 %v1357, %v1358
    %v1360 = vsel %vm67, %v1330, 0.0
    %v1361 = vadd.f32 %v1359, %v1360
    %v1362 = vrot.slane %v1361, 4
    %v1363 = vadd.f32 %v1361, %v1362
    %v1364 = vrot.slane %v1363, 2
    %v1365 = vadd.f32 %v1363, %v1364
    %v1366 = vrot.slane %v1365, 1
    %v1367 = vadd.f32 %v1365, %v1366
    %v1368 = vmul.f32 %v1314, 0.0078125
    %v1369 = vmul.f32 %v1367, 0.0078125
    %v1370 = vmul.f32 %v1368, %v1368
    %v1371 = vsub.f32 %v1369, %v1370
    %v1372 = vmax.f32 %v1371, 0.0
    %v1373 = vadd.f32 %v1372, 1e-05
    %v1374 = vrsqrt.pop %v1373
    %v1375 = vld [vmem:[%s2] sm:$0x1]
    %v1376 = vmul.f32 %v1375, %v1374
    %v1377 = vld [vmem:[%s3] sm:$0x1]
    %v1378 = vmul.f32 %v1368, %v1376
    %v1379 = vsub.f32 %v1377, %v1378
    %v1381 = vlaneseq
    %v1382 = vshrl.u32 %v1381, 7
    %v1383 = vsub.s32 0, %v1382
    %v1384 = vrot.slane %v1376, %v1383
    %v1386 = vmul.f32 %v1262, %v1384
    %v1387 = vmul.f32 %v1263, %v1384
    %v1388 = vmul.f32 %v1264, %v1384
    %v1389 = vmul.f32 %v1265, %v1384
    %v1390 = vmul.f32 %v1266, %v1384
    %v1391 = vmul.f32 %v1267, %v1384
    %v1392 = vmul.f32 %v1268, %v1384
    %v1393 = vmul.f32 %v1269, %v1384
    %v1394 = vmul.f32 %v1270, %v1384
    %v1395 = vmul.f32 %v1271, %v1384
    %v1396 = vmul.f32 %v1272, %v1384
    %v1397 = vmul.f32 %v1273, %v1384
    %v1398 = vmul.f32 %v1274, %v1384
    %v1399 = vmul.f32 %v1275, %v1384
    %v1400 = vmul.f32 %v1276, %v1384
    %v1401 = vmul.f32 %v1277, %v1384
    %v1403 = vlaneseq
    %v1404 = vshrl.u32 %v1403, 7
    %v1405 = vsub.s32 0, %v1404
    %v1406 = vrot.slane %v1379, %v1405
    %v1408 = vadd.f32 %v1386, %v1406
    %v1409 = vadd.f32 %v1387, %v1406
    %v1410 = vadd.f32 %v1388, %v1406
    %v1411 = vadd.f32 %v1389, %v1406
    %v1412 = vadd.f32 %v1390, %v1406
    %v1413 = vadd.f32 %v1391, %v1406
    %v1414 = vadd.f32 %v1392, %v1406
    %v1415 = vadd.f32 %v1393, %v1406
    %v1416 = vadd.f32 %v1394, %v1406
    %v1417 = vadd.f32 %v1395, %v1406
    %v1418 = vadd.f32 %v1396, %v1406
    %v1419 = vadd.f32 %v1397, %v1406
    %v1420 = vadd.f32 %v1398, %v1406
    %v1421 = vadd.f32 %v1399, %v1406
    %v1422 = vadd.f32 %v1400, %v1406
    %v1423 = vadd.f32 %v1401, %v1406
    %1424 = vst.msk [vmem:[%s78 + $0x1] sm:$0xff] %vm67, %v1408
    %1425 = vst.msk [vmem:[%s78 + $0x11] sm:$0xff] %vm67, %v1409
    %1426 = vst.msk [vmem:[%s78 + $0x21] sm:$0xff] %vm67, %v1410
    %1427 = vst.msk [vmem:[%s78 + $0x31] sm:$0xff] %vm67, %v1411
    %1428 = vst.msk [vmem:[%s78 + $0x41] sm:$0xff] %vm67, %v1412
    %1429 = vst.msk [vmem:[%s78 + $0x51] sm:$0xff] %vm67, %v1413
    %1430 = vst.msk [vmem:[%s78 + $0x61] sm:$0xff] %vm67, %v1414
    %1431 = vst.msk [vmem:[%s78 + $0x71] sm:$0xff] %vm67, %v1415
    %1432 = vst.msk [vmem:[%s78 + $0x81] sm:$0xff] %vm67, %v1416
    %1433 = vst.msk [vmem:[%s78 + $0x91] sm:$0xff] %vm67, %v1417
    %1434 = vst.msk [vmem:[%s78 + $0xa1] sm:$0xff] %vm67, %v1418
    %1435 = vst.msk [vmem:[%s78 + $0xb1] sm:$0xff] %vm67, %v1419
    %1436 = vst.msk [vmem:[%s78 + $0xc1] sm:$0xff] %vm67, %v1420
    %1437 = vst.msk [vmem:[%s78 + $0xd1] sm:$0xff] %vm67, %v1421
    %1438 = vst.msk [vmem:[%s78 + $0xe1] sm:$0xff] %vm67, %v1422
    %1439 = vst.msk [vmem:[%s78 + $0xf1] sm:$0xff] %vm67, %v1423
    %v1440 = vld [vmem:[#allocation2] sm:$0xff]
    %v1441 = vld [vmem:[#allocation2 + $0x10] sm:$0xff]
    %v1442 = vld [vmem:[#allocation2 + $0x20] sm:$0xff]
    %v1443 = vld [vmem:[#allocation2 + $0x30] sm:$0xff]
    %v1444 = vld [vmem:[#allocation2 + $0x40] sm:$0xff]
    %v1445 = vld [vmem:[#allocation2 + $0x50] sm:$0xff]
    %v1446 = vld [vmem:[#allocation2 + $0x60] sm:$0xff]
    %v1447 = vld [vmem:[#allocation2 + $0x70] sm:$0xff]
    %v1448 = vld [vmem:[#allocation2 + $0x80] sm:$0xff]
    %v1449 = vld [vmem:[#allocation2 + $0x90] sm:$0xff]
    %v1450 = vld [vmem:[#allocation2 + $0xa0] sm:$0xff]
    %v1451 = vld [vmem:[#allocation2 + $0xb0] sm:$0xff]
    %v1452 = vld [vmem:[#allocation2 + $0xc0] sm:$0xff]
    %v1453 = vld [vmem:[#allocation2 + $0xd0] sm:$0xff]
    %v1454 = vld [vmem:[#allocation2 + $0xe0] sm:$0xff]
    %v1455 = vld [vmem:[#allocation2 + $0xf0] sm:$0xff]
    %v1456 = vld [vmem:[#allocation7] sm:$0xff]
    %v1457 = vld [vmem:[#allocation7 + $0x8] sm:$0xff]
    %v1458 = vld [vmem:[#allocation7 + $0x10] sm:$0xff]
    %v1459 = vld [vmem:[#allocation7 + $0x18] sm:$0xff]
    %v1460 = vld [vmem:[%s78] sm:$0xff]
    %v1461 = vld [vmem:[%s78 + $0x10] sm:$0xff]
    %v1462 = vld [vmem:[%s78 + $0x20] sm:$0xff]
    %v1463 = vld [vmem:[%s78 + $0x30] sm:$0xff]
    %v1464 = vld [vmem:[%s78 + $0x40] sm:$0xff]
    %v1465 = vld [vmem:[%s78 + $0x50] sm:$0xff]
    %v1466 = vld [vmem:[%s78 + $0x60] sm:$0xff]
    %v1467 = vld [vmem:[%s78 + $0x70] sm:$0xff]
    %v1468 = vld [vmem:[%s78 + $0x80] sm:$0xff]
    %v1469 = vld [vmem:[%s78 + $0x90] sm:$0xff]
    %v1470 = vld [vmem:[%s78 + $0xa0] sm:$0xff]
    %v1471 = vld [vmem:[%s78 + $0xb0] sm:$0xff]
    %v1472 = vld [vmem:[%s78 + $0xc0] sm:$0xff]
    %v1473 = vld [vmem:[%s78 + $0xd0] sm:$0xff]
    %v1474 = vld [vmem:[%s78 + $0xe0] sm:$0xff]
    %v1475 = vld [vmem:[%s78 + $0xf0] sm:$0xff]
    %s1476 = scalar_lea.vmem [#allocation7], 32
    %v1477 = vld [vmem:[%s1476] sm:$0xff]
    %v1478 = vld [vmem:[%s1476 + $0x8] sm:$0xff]
    %v1479 = vld [vmem:[%s1476 + $0x10] sm:$0xff]
    %v1480 = vld [vmem:[%s1476 + $0x18] sm:$0xff]
    %v1482 = vsel %vm67, %v1460, 0
    %v1485 = vsel %vm67, %v1461, 0
    %v1488 = vsel %vm67, %v1462, 0
    %v1491 = vsel %vm67, %v1463, 0
    %v1494 = vsel %vm67, %v1464, 0
    %v1497 = vsel %vm67, %v1465, 0
    %v1500 = vsel %vm67, %v1466, 0
    %v1503 = vsel %vm67, %v1467, 0
    %v1506 = vsel %vm67, %v1468, 0
    %v1509 = vsel %vm67, %v1469, 0
    %v1512 = vsel %vm67, %v1470, 0
    %v1515 = vsel %vm67, %v1471, 0
    %v1518 = vsel %vm67, %v1472, 0
    %v1521 = vsel %vm67, %v1473, 0
    %v1524 = vsel %vm67, %v1474, 0
    %v1527 = vsel %vm67, %v1475, 0
    %1529 = vmatprep.subr.mxu0 0.0
    %1530 = vmatpush1.msra.mxu0 %v1477
    %1531 = vmatprep.subr.mxu0 0.0
    %1532 = vmatpush1.msra.mxu0 %v1478
    %1533 = vmatprep.subr.mxu0 0.0
    %1534 = vmatpush1.msra.mxu0 %v1479
    %1535 = vmatprep.subr.mxu0 0.0
    %1536 = vmatpush1.msra.mxu0 %v1480
    %1537 = vmatprep.subr.mxu0 0.0
    %1538 = vmatpush1.msra.mxu0 0.0
    %1539 = vmatprep.subr.mxu0 0.0
    %1540 = vmatpush1.msra.mxu0 0.0
    %1541 = vmatprep.subr.mxu0 0.0
    %1542 = vmatpush1.msra.mxu0 0.0
    %1543 = vmatprep.subr.mxu0 0.0
    %1544 = vmatpush1.msra.mxu0 0.0
    %1545 = vmatprep.subr.mxu0 0.0
    %1546 = vmatpush1.msra.mxu0 0.0
    %1547 = vmatprep.subr.mxu0 0.0
    %1548 = vmatpush1.msra.mxu0 0.0
    %1549 = vmatprep.subr.mxu0 0.0
    %1550 = vmatpush1.msra.mxu0 0.0
    %1551 = vmatprep.subr.mxu0 0.0
    %1552 = vmatpush1.msra.mxu0 0.0
    %1553 = vmatprep.subr.mxu0 0.0
    %1554 = vmatpush1.msra.mxu0 0.0
    %1555 = vmatprep.subr.mxu0 0.0
    %1556 = vmatpush1.msra.mxu0 0.0
    %1557 = vmatprep.subr.mxu0 0.0
    %1558 = vmatpush1.msra.mxu0 0.0
    %1559 = vmatprep.subr.mxu0 0.0
    %1560 = vmatpush1.msra.mxu0 0.0
    %1561 = vmatprep.subr.mxu0 0.0
    %1562 = vmatpush1.msra.mxu0 0.0
    %1563 = vmatprep.subr.mxu0 0.0
    %1564 = vmatpush1.msra.mxu0 0.0
    %1565 = vmatprep.subr.mxu0 0.0
    %1566 = vmatpush1.msra.mxu0 0.0
    %1567 = vmatprep.subr.mxu0 0.0
    %1568 = vmatpush1.msra.mxu0 0.0
    %1569 = vmatprep.subr.mxu0 0.0
    %1570 = vmatpush1.msra.mxu0 0.0
    %1571 = vmatprep.subr.mxu0 0.0
    %1572 = vmatpush1.msra.mxu0 0.0
    %1573 = vmatprep.subr.mxu0 0.0
    %1574 = vmatpush1.msra.mxu0 0.0
    %1575 = vmatprep.subr.mxu0 0.0
    %1576 = vmatpush1.msra.mxu0 0.0
    %1577 = vmatprep.subr.mxu0 0.0
    %1578 = vmatpush1.msra.mxu0 0.0
    %1579 = vmatprep.subr.mxu0 0.0
    %1580 = vmatpush1.msra.mxu0 0.0
    %1581 = vmatprep.subr.mxu0 0.0
    %1582 = vmatpush1.msra.mxu0 0.0
    %1583 = vmatprep.subr.mxu0 0.0
    %1584 = vmatpush1.msra.mxu0 0.0
    %1585 = vmatprep.subr.mxu0 0.0
    %1586 = vmatpush1.msra.mxu0 0.0
    %1587 = vmatprep.subr.mxu0 0.0
    %1588 = vmatpush1.msra.mxu0 0.0
    %1589 = vmatprep.subr.mxu0 0.0
    %1590 = vmatpush1.msra.mxu0 0.0
    %1591 = vmatprep.subr.mxu0 0.0
    %1592 = vmatpush1.msra.mxu0 0.0
    %1593 = vmatprep.mubr.f32.mxu0 0.0
    %1594 = vmatmul.mubr.f32.gmra.mrb[0].mxu0 %v1482
    %v1595 = vpop.f32.mrb[0].mxu0
    %v1596 = vadd.f32 0.0, %v1595
    %v1597 = vpop.f32.mrb[0].mxu0
    %1598 = vmatprep.mubr.f32.mxu0 0.0
    %1599 = vmatmul.mubr.f32.gmra.mrb[0].mxu0 %v1485
    %v1600 = vpop.f32.mrb[0].mxu0
    %v1601 = vadd.f32 0.0, %v1600
    %v1602 = vpop.f32.mrb[0].mxu0
    %1603 = vmatprep.mubr.f32.mxu0 0.0
    %1604 = vmatmul.mubr.f32.gmra.mrb[0].mxu0 %v1488
    %v1605 = vpop.f32.mrb[0].mxu0
    %v1606 = vadd.f32 0.0, %v1605
    %v1607 = vpop.f32.mrb[0].mxu0
    %1608 = vmatprep.mubr.f32.mxu0 0.0
    %1609 = vmatmul.mubr.f32.gmra.mrb[0].mxu0 %v1491
    %v1610 = vpop.f32.mrb[0].mxu0
    %v1611 = vadd.f32 0.0, %v1610
    %v1612 = vpop.f32.mrb[0].mxu0
    %1613 = vmatprep.mubr.f32.mxu0 0.0
    %1614 = vmatmul.mubr.f32.gmra.mrb[0].mxu0 %v1494
    %v1615 = vpop.f32.mrb[0].mxu0
    %v1616 = vadd.f32 0.0, %v1615
    %v1617 = vpop.f32.mrb[0].mxu0
    %1618 = vmatprep.mubr.f32.mxu0 0.0
    %1619 = vmatmul.mubr.f32.gmra.mrb[0].mxu0 %v1497
    %v1620 = vpop.f32.mrb[0].mxu0
    %v1621 = vadd.f32 0.0, %v1620
    %v1622 = vpop.f32.mrb[0].mxu0
    %1623 = vmatprep.mubr.f32.mxu0 0.0
    %1624 = vmatmul.mubr.f32.gmra.mrb[0].mxu0 %v1500
    %v1625 = vpop.f32.mrb[0].mxu0
    %v1626 = vadd.f32 0.0, %v1625
    %v1627 = vpop.f32.mrb[0].mxu0
    %1628 = vmatprep.mubr.f32.mxu0 0.0
    %1629 = vmatmul.mubr.f32.gmra.mrb[0].mxu0 %v1503
    %v1630 = vpop.f32.mrb[0].mxu0
    %v1631 = vadd.f32 0.0, %v1630
    %v1632 = vpop.f32.mrb[0].mxu0
    %1633 = vmatprep.mubr.f32.mxu0 0.0
    %1634 = vmatmul.mubr.f32.gmra.mrb[0].mxu0 %v1506
    %v1635 = vpop.f32.mrb[0].mxu0
    %v1636 = vadd.f32 0.0, %v1635
    %v1637 = vpop.f32.mrb[0].mxu0
    %1638 = vmatprep.mubr.f32.mxu0 0.0
    %1639 = vmatmul.mubr.f32.gmra.mrb[0].mxu0 %v1509
    %v1640 = vpop.f32.mrb[0].mxu0
    %v1641 = vadd.f32 0.0, %v1640
    %v1642 = vpop.f32.mrb[0].mxu0
    %1643 = vmatprep.mubr.f32.mxu0 0.0
    %1644 = vmatmul.mubr.f32.gmra.mrb[0].mxu0 %v1512
    %v1645 = vpop.f32.mrb[0].mxu0
    %v1646 = vadd.f32 0.0, %v1645
    %v1647 = vpop.f32.mrb[0].mxu0
    %1648 = vmatprep.mubr.f32.mxu0 0.0
    %1649 = vmatmul.mubr.f32.gmra.mrb[0].mxu0 %v1515
    %v1650 = vpop.f32.mrb[0].mxu0
    %v1651 = vadd.f32 0.0, %v1650
    %v1652 = vpop.f32.mrb[0].mxu0
    %1653 = vmatprep.mubr.f32.mxu0 0.0
    %1654 = vmatmul.mubr.f32.gmra.mrb[0].mxu0 %v1518
    %v1655 = vpop.f32.mrb[0].mxu0
    %v1656 = vadd.f32 0.0, %v1655
    %v1657 = vpop.f32.mrb[0].mxu0
    %1658 = vmatprep.mubr.f32.mxu0 0.0
    %1659 = vmatmul.mubr.f32.gmra.mrb[0].mxu0 %v1521
    %v1660 = vpop.f32.mrb[0].mxu0
    %v1661 = vadd.f32 0.0, %v1660
    %v1662 = vpop.f32.mrb[0].mxu0
    %1663 = vmatprep.mubr.f32.mxu0 0.0
    %1664 = vmatmul.mubr.f32.gmra.mrb[0].mxu0 %v1524
    %v1665 = vpop.f32.mrb[0].mxu0
    %v1666 = vadd.f32 0.0, %v1665
    %v1667 = vpop.f32.mrb[0].mxu0
    %1668 = vmatprep.mubr.f32.mxu0 0.0
    %1669 = vmatmul.mubr.f32.gmra.mrb[0].mxu0 %v1527
    %v1670 = vpop.f32.mrb[0].mxu0
    %v1671 = vadd.f32 0.0, %v1670
    %v1672 = vpop.f32.mrb[0].mxu0
    %1673 = vdwg.mxu0
    %v1675 = vsel %vm67, %v1440, 0
    %v1678 = vsel %vm67, %v1441, 0
    %v1681 = vsel %vm67, %v1442, 0
    %v1684 = vsel %vm67, %v1443, 0
    %v1687 = vsel %vm67, %v1444, 0
    %v1690 = vsel %vm67, %v1445, 0
    %v1693 = vsel %vm67, %v1446, 0
    %v1696 = vsel %vm67, %v1447, 0
    %v1699 = vsel %vm67, %v1448, 0
    %v1702 = vsel %vm67, %v1449, 0
    %v1705 = vsel %vm67, %v1450, 0
    %v1708 = vsel %vm67, %v1451, 0
    %v1711 = vsel %vm67, %v1452, 0
    %v1714 = vsel %vm67, %v1453, 0
    %v1717 = vsel %vm67, %v1454, 0
    %v1720 = vsel %vm67, %v1455, 0
    %1722 = vmatprep.subr.mxu0 0.0
    %1723 = vmatpush1.msra.mxu0 %v1456
    %1724 = vmatprep.subr.mxu0 0.0
    %1725 = vmatpush1.msra.mxu0 %v1457
    %1726 = vmatprep.subr.mxu0 0.0
    %1727 = vmatpush1.msra.mxu0 %v1458
    %1728 = vmatprep.subr.mxu0 0.0
    %1729 = vmatpush1.msra.mxu0 %v1459
    %1730 = vmatprep.subr.mxu0 0.0
    %1731 = vmatpush1.msra.mxu0 0.0
    %1732 = vmatprep.subr.mxu0 0.0
    %1733 = vmatpush1.msra.mxu0 0.0
    %1734 = vmatprep.subr.mxu0 0.0
    %1735 = vmatpush1.msra.mxu0 0.0
    %1736 = vmatprep.subr.mxu0 0.0
    %1737 = vmatpush1.msra.mxu0 0.0
    %1738 = vmatprep.subr.mxu0 0.0
    %1739 = vmatpush1.msra.mxu0 0.0
    %1740 = vmatprep.subr.mxu0 0.0
    %1741 = vmatpush1.msra.mxu0 0.0
    %1742 = vmatprep.subr.mxu0 0.0
    %1743 = vmatpush1.msra.mxu0 0.0
    %1744 = vmatprep.subr.mxu0 0.0
    %1745 = vmatpush1.msra.mxu0 0.0
    %1746 = vmatprep.subr.mxu0 0.0
    %1747 = vmatpush1.msra.mxu0 0.0
    %1748 = vmatprep.subr.mxu0 0.0
    %1749 = vmatpush1.msra.mxu0 0.0
    %1750 = vmatprep.subr.mxu0 0.0
    %1751 = vmatpush1.msra.mxu0 0.0
    %1752 = vmatprep.subr.mxu0 0.0
    %1753 = vmatpush1.msra.mxu0 0.0
    %1754 = vmatprep.subr.mxu0 0.0
    %1755 = vmatpush1.msra.mxu0 0.0
    %1756 = vmatprep.subr.mxu0 0.0
    %1757 = vmatpush1.msra.mxu0 0.0
    %1758 = vmatprep.subr.mxu0 0.0
    %1759 = vmatpush1.msra.mxu0 0.0
    %1760 = vmatprep.subr.mxu0 0.0
    %1761 = vmatpush1.msra.mxu0 0.0
    %1762 = vmatprep.subr.mxu0 0.0
    %1763 = vmatpush1.msra.mxu0 0.0
    %1764 = vmatprep.subr.mxu0 0.0
    %1765 = vmatpush1.msra.mxu0 0.0
    %1766 = vmatprep.subr.mxu0 0.0
    %1767 = vmatpush1.msra.mxu0 0.0
    %1768 = vmatprep.subr.mxu0 0.0
    %1769 = vmatpush1.msra.mxu0 0.0
    %1770 = vmatprep.subr.mxu0 0.0
    %1771 = vmatpush1.msra.mxu0 0.0
    %1772 = vmatprep.subr.mxu0 0.0
    %1773 = vmatpush1.msra.mxu0 0.0
    %1774 = vmatprep.subr.mxu0 0.0
    %1775 = vmatpush1.msra.mxu0 0.0
    %1776 = vmatprep.subr.mxu0 0.0
    %1777 = vmatpush1.msra.mxu0 0.0
    %1778 = vmatprep.subr.mxu0 0.0
    %1779 = vmatpush1.msra.mxu0 0.0
    %1780 = vmatprep.subr.mxu0 0.0
    %1781 = vmatpush1.msra.mxu0 0.0
    %1782 = vmatprep.subr.mxu0 0.0
    %1783 = vmatpush1.msra.mxu0 0.0
    %1784 = vmatprep.subr.mxu0 0.0
    %1785 = vmatpush1.msra.mxu0 0.0
    %1786 = vmatprep.mubr.f32.mxu0 0.0
    %1787 = vmatmul.mubr.f32.gmra.mrb[0].mxu0 %v1675
    %v1788 = vpop.f32.mrb[0].mxu0
    %v1789 = vadd.f32 %v1596, %v1788
    %v1790 = vpop.f32.mrb[0].mxu0
    %1791 = vmatprep.mubr.f32.mxu0 0.0
    %1792 = vmatmul.mubr.f32.gmra.mrb[0].mxu0 %v1678
    %v1793 = vpop.f32.mrb[0].mxu0
    %v1794 = vadd.f32 %v1601, %v1793
    %v1795 = vpop.f32.mrb[0].mxu0
    %1796 = vmatprep.mubr.f32.mxu0 0.0
    %1797 = vmatmul.mubr.f32.gmra.mrb[0].mxu0 %v1681
    %v1798 = vpop.f32.mrb[0].mxu0
    %v1799 = vadd.f32 %v1606, %v1798
    %v1800 = vpop.f32.mrb[0].mxu0
    %1801 = vmatprep.mubr.f32.mxu0 0.0
    %1802 = vmatmul.mubr.f32.gmra.mrb[0].mxu0 %v1684
    %v1803 = vpop.f32.mrb[0].mxu0
    %v1804 = vadd.f32 %v1611, %v1803
    %v1805 = vpop.f32.mrb[0].mxu0
    %1806 = vmatprep.mubr.f32.mxu0 0.0
    %1807 = vmatmul.mubr.f32.gmra.mrb[0].mxu0 %v1687
    %v1808 = vpop.f32.mrb[0].mxu0
    %v1809 = vadd.f32 %v1616, %v1808
    %v1810 = vpop.f32.mrb[0].mxu0
    %1811 = vmatprep.mubr.f32.mxu0 0.0
    %1812 = vmatmul.mubr.f32.gmra.mrb[0].mxu0 %v1690
    %v1813 = vpop.f32.mrb[0].mxu0
    %v1814 = vadd.f32 %v1621, %v1813
    %v1815 = vpop.f32.mrb[0].mxu0
    %1816 = vmatprep.mubr.f32.mxu0 0.0
    %1817 = vmatmul.mubr.f32.gmra.mrb[0].mxu0 %v1693
    %v1818 = vpop.f32.mrb[0].mxu0
    %v1819 = vadd.f32 %v1626, %v1818
    %v1820 = vpop.f32.mrb[0].mxu0
    %1821 = vmatprep.mubr.f32.mxu0 0.0
    %1822 = vmatmul.mubr.f32.gmra.mrb[0].mxu0 %v1696
    %v1823 = vpop.f32.mrb[0].mxu0
    %v1824 = vadd.f32 %v1631, %v1823
    %v1825 = vpop.f32.mrb[0].mxu0
    %1826 = vmatprep.mubr.f32.mxu0 0.0
    %1827 = vmatmul.mubr.f32.gmra.mrb[0].mxu0 %v1699
    %v1828 = vpop.f32.mrb[0].mxu0
    %v1829 = vadd.f32 %v1636, %v1828
    %v1830 = vpop.f32.mrb[0].mxu0
    %1831 = vmatprep.mubr.f32.mxu0 0.0
    %1832 = vmatmul.mubr.f32.gmra.mrb[0].mxu0 %v1702
    %v1833 = vpop.f32.mrb[0].mxu0
    %v1834 = vadd.f32 %v1641, %v1833
    %v1835 = vpop.f32.mrb[0].mxu0
    %1836 = vmatprep.mubr.f32.mxu0 0.0
    %1837 = vmatmul.mubr.f32.gmra.mrb[0].mxu0 %v1705
    %v1838 = vpop.f32.mrb[0].mxu0
    %v1839 = vadd.f32 %v1646, %v1838
    %v1840 = vpop.f32.mrb[0].mxu0
    %1841 = vmatprep.mubr.f32.mxu0 0.0
    %1842 = vmatmul.mubr.f32.gmra.mrb[0].mxu0 %v1708
    %v1843 = vpop.f32.mrb[0].mxu0
    %v1844 = vadd.f32 %v1651, %v1843
    %v1845 = vpop.f32.mrb[0].mxu0
    %1846 = vmatprep.mubr.f32.mxu0 0.0
    %1847 = vmatmul.mubr.f32.gmra.mrb[0].mxu0 %v1711
    %v1848 = vpop.f32.mrb[0].mxu0
    %v1849 = vadd.f32 %v1656, %v1848
    %v1850 = vpop.f32.mrb[0].mxu0
    %1851 = vmatprep.mubr.f32.mxu0 0.0
    %1852 = vmatmul.mubr.f32.gmra.mrb[0].mxu0 %v1714
    %v1853 = vpop.f32.mrb[0].mxu0
    %v1854 = vadd.f32 %v1661, %v1853
    %v1855 = vpop.f32.mrb[0].mxu0
    %1856 = vmatprep.mubr.f32.mxu0 0.0
    %1857 = vmatmul.mubr.f32.gmra.mrb[0].mxu0 %v1717
    %v1858 = vpop.f32.mrb[0].mxu0
    %v1859 = vadd.f32 %v1666, %v1858
    %v1860 = vpop.f32.mrb[0].mxu0
    %1861 = vmatprep.mubr.f32.mxu0 0.0
    %1862 = vmatmul.mubr.f32.gmra.mrb[0].mxu0 %v1720
    %v1863 = vpop.f32.mrb[0].mxu0
    %v1864 = vadd.f32 %v1671, %v1863
    %v1865 = vpop.f32.mrb[0].mxu0
    %1866 = vdwg.mxu0
    %v1867 = vld [vmem:[%s571] sm:$0xff]
    %v1868 = vld [vmem:[%s571 + $0x10] sm:$0xff]
    %v1869 = vld [vmem:[%s571 + $0x20] sm:$0xff]
    %v1870 = vld [vmem:[%s571 + $0x30] sm:$0xff]
    %v1871 = vld [vmem:[%s571 + $0x40] sm:$0xff]
    %v1872 = vld [vmem:[%s571 + $0x50] sm:$0xff]
    %v1873 = vld [vmem:[%s571 + $0x60] sm:$0xff]
    %v1874 = vld [vmem:[%s571 + $0x70] sm:$0xff]
    %v1875 = vld [vmem:[%s571 + $0x80] sm:$0xff]
    %v1876 = vld [vmem:[%s571 + $0x90] sm:$0xff]
    %v1877 = vld [vmem:[%s571 + $0xa0] sm:$0xff]
    %v1878 = vld [vmem:[%s571 + $0xb0] sm:$0xff]
    %v1879 = vld [vmem:[%s571 + $0xc0] sm:$0xff]
    %v1880 = vld [vmem:[%s571 + $0xd0] sm:$0xff]
    %v1881 = vld [vmem:[%s571 + $0xe0] sm:$0xff]
    %v1882 = vld [vmem:[%s571 + $0xf0] sm:$0xff]
    %s1883 = scalar_lea.vmem [#allocation7], 64
    %v1884 = vld [vmem:[%s1883] sm:$0xff]
    %v1885 = vld [vmem:[%s1883 + $0x8] sm:$0xff]
    %v1886 = vld [vmem:[%s1883 + $0x10] sm:$0xff]
    %v1887 = vld [vmem:[%s1883 + $0x18] sm:$0xff]
    %v1889 = vsel %vm67, %v1867, 0
    %v1892 = vsel %vm67, %v1868, 0
    %v1895 = vsel %vm67, %v1869, 0
    %v1898 = vsel %vm67, %v1870, 0
    %v1901 = vsel %vm67, %v1871, 0
    %v1904 = vsel %vm67, %v1872, 0
    %v1907 = vsel %vm67, %v1873, 0
    %v1910 = vsel %vm67, %v1874, 0
    %v1913 = vsel %vm67, %v1875, 0
    %v1916 = vsel %vm67, %v1876, 0
    %v1919 = vsel %vm67, %v1877, 0
    %v1922 = vsel %vm67, %v1878, 0
    %v1925 = vsel %vm67, %v1879, 0
    %v1928 = vsel %vm67, %v1880, 0
    %v1931 = vsel %vm67, %v1881, 0
    %v1934 = vsel %vm67, %v1882, 0
    %1936 = vmatprep.subr.mxu0 0.0
    %1937 = vmatpush1.msra.mxu0 %v1884
    %1938 = vmatprep.subr.mxu0 0.0
    %1939 = vmatpush1.msra.mxu0 %v1885
    %1940 = vmatprep.subr.mxu0 0.0
    %1941 = vmatpush1.msra.mxu0 %v1886
    %1942 = vmatprep.subr.mxu0 0.0
    %1943 = vmatpush1.msra.mxu0 %v1887
    %1944 = vmatprep.subr.mxu0 0.0
    %1945 = vmatpush1.msra.mxu0 0.0
    %1946 = vmatprep.subr.mxu0 0.0
    %1947 = vmatpush1.msra.mxu0 0.0
    %1948 = vmatprep.subr.mxu0 0.0
    %1949 = vmatpush1.msra.mxu0 0.0
    %1950 = vmatprep.subr.mxu0 0.0
    %1951 = vmatpush1.msra.mxu0 0.0
    %1952 = vmatprep.subr.mxu0 0.0
    %1953 = vmatpush1.msra.mxu0 0.0
    %1954 = vmatprep.subr.mxu0 0.0
    %1955 = vmatpush1.msra.mxu0 0.0
    %1956 = vmatprep.subr.mxu0 0.0
    %1957 = vmatpush1.msra.mxu0 0.0
    %1958 = vmatprep.subr.mxu0 0.0
    %1959 = vmatpush1.msra.mxu0 0.0
    %1960 = vmatprep.subr.mxu0 0.0
    %1961 = vmatpush1.msra.mxu0 0.0
    %1962 = vmatprep.subr.mxu0 0.0
    %1963 = vmatpush1.msra.mxu0 0.0
    %1964 = vmatprep.subr.mxu0 0.0
    %1965 = vmatpush1.msra.mxu0 0.0
    %1966 = vmatprep.subr.mxu0 0.0
    %1967 = vmatpush1.msra.mxu0 0.0
    %1968 = vmatprep.subr.mxu0 0.0
    %1969 = vmatpush1.msra.mxu0 0.0
    %1970 = vmatprep.subr.mxu0 0.0
    %1971 = vmatpush1.msra.mxu0 0.0
    %1972 = vmatprep.subr.mxu0 0.0
    %1973 = vmatpush1.msra.mxu0 0.0
    %1974 = vmatprep.subr.mxu0 0.0
    %1975 = vmatpush1.msra.mxu0 0.0
    %1976 = vmatprep.subr.mxu0 0.0
    %1977 = vmatpush1.msra.mxu0 0.0
    %1978 = vmatprep.subr.mxu0 0.0
    %1979 = vmatpush1.msra.mxu0 0.0
    %1980 = vmatprep.subr.mxu0 0.0
    %1981 = vmatpush1.msra.mxu0 0.0
    %1982 = vmatprep.subr.mxu0 0.0
    %1983 = vmatpush1.msra.mxu0 0.0
    %1984 = vmatprep.subr.mxu0 0.0
    %1985 = vmatpush1.msra.mxu0 0.0
    %1986 = vmatprep.subr.mxu0 0.0
    %1987 = vmatpush1.msra.mxu0 0.0
    %1988 = vmatprep.subr.mxu0 0.0
    %1989 = vmatpush1.msra.mxu0 0.0
    %1990 = vmatprep.subr.mxu0 0.0
    %1991 = vmatpush1.msra.mxu0 0.0
    %1992 = vmatprep.subr.mxu0 0.0
    %1993 = vmatpush1.msra.mxu0 0.0
    %1994 = vmatprep.subr.mxu0 0.0
    %1995 = vmatpush1.msra.mxu0 0.0
    %1996 = vmatprep.subr.mxu0 0.0
    %1997 = vmatpush1.msra.mxu0 0.0
    %1998 = vmatprep.subr.mxu0 0.0
    %1999 = vmatpush1.msra.mxu0 0.0
    %2000 = vmatprep.mubr.f32.mxu0 0.0
    %2001 = vmatmul.mubr.f32.gmra.mrb[0].mxu0 %v1889
    %v2002 = vpop.f32.mrb[0].mxu0
    %v2003 = vadd.f32 0.0, %v2002
    %v2004 = vpop.f32.mrb[0].mxu0
    %2005 = vmatprep.mubr.f32.mxu0 0.0
    %2006 = vmatmul.mubr.f32.gmra.mrb[0].mxu0 %v1892
    %v2007 = vpop.f32.mrb[0].mxu0
    %v2008 = vadd.f32 0.0, %v2007
    %v2009 = vpop.f32.mrb[0].mxu0
    %2010 = vmatprep.mubr.f32.mxu0 0.0
    %2011 = vmatmul.mubr.f32.gmra.mrb[0].mxu0 %v1895
    %v2012 = vpop.f32.mrb[0].mxu0
    %v2013 = vadd.f32 0.0, %v2012
    %v2014 = vpop.f32.mrb[0].mxu0
    %2015 = vmatprep.mubr.f32.mxu0 0.0
    %2016 = vmatmul.mubr.f32.gmra.mrb[0].mxu0 %v1898
    %v2017 = vpop.f32.mrb[0].mxu0
    %v2018 = vadd.f32 0.0, %v2017
    %v2019 = vpop.f32.mrb[0].mxu0
    %2020 = vmatprep.mubr.f32.mxu0 0.0
    %2021 = vmatmul.mubr.f32.gmra.mrb[0].mxu0 %v1901
    %v2022 = vpop.f32.mrb[0].mxu0
    %v2023 = vadd.f32 0.0, %v2022
    %v2024 = vpop.f32.mrb[0].mxu0
    %2025 = vmatprep.mubr.f32.mxu0 0.0
    %2026 = vmatmul.mubr.f32.gmra.mrb[0].mxu0 %v1904
    %v2027 = vpop.f32.mrb[0].mxu0
    %v2028 = vadd.f32 0.0, %v2027
    %v2029 = vpop.f32.mrb[0].mxu0
    %2030 = vmatprep.mubr.f32.mxu0 0.0
    %2031 = vmatmul.mubr.f32.gmra.mrb[0].mxu0 %v1907
    %v2032 = vpop.f32.mrb[0].mxu0
    %v2033 = vadd.f32 0.0, %v2032
    %v2034 = vpop.f32.mrb[0].mxu0
    %2035 = vmatprep.mubr.f32.mxu0 0.0
    %2036 = vmatmul.mubr.f32.gmra.mrb[0].mxu0 %v1910
    %v2037 = vpop.f32.mrb[0].mxu0
    %v2038 = vadd.f32 0.0, %v2037
    %v2039 = vpop.f32.mrb[0].mxu0
    %2040 = vmatprep.mubr.f32.mxu0 0.0
    %2041 = vmatmul.mubr.f32.gmra.mrb[0].mxu0 %v1913
    %v2042 = vpop.f32.mrb[0].mxu0
    %v2043 = vadd.f32 0.0, %v2042
    %v2044 = vpop.f32.mrb[0].mxu0
    %2045 = vmatprep.mubr.f32.mxu0 0.0
    %2046 = vmatmul.mubr.f32.gmra.mrb[0].mxu0 %v1916
    %v2047 = vpop.f32.mrb[0].mxu0
    %v2048 = vadd.f32 0.0, %v2047
    %v2049 = vpop.f32.mrb[0].mxu0
    %2050 = vmatprep.mubr.f32.mxu0 0.0
    %2051 = vmatmul.mubr.f32.gmra.mrb[0].mxu0 %v1919
    %v2052 = vpop.f32.mrb[0].mxu0
    %v2053 = vadd.f32 0.0, %v2052
    %v2054 = vpop.f32.mrb[0].mxu0
    %2055 = vmatprep.mubr.f32.mxu0 0.0
    %2056 = vmatmul.mubr.f32.gmra.mrb[0].mxu0 %v1922
    %v2057 = vpop.f32.mrb[0].mxu0
    %v2058 = vadd.f32 0.0, %v2057
    %v2059 = vpop.f32.mrb[0].mxu0
    %2060 = vmatprep.mubr.f32.mxu0 0.0
    %2061 = vmatmul.mubr.f32.gmra.mrb[0].mxu0 %v1925
    %v2062 = vpop.f32.mrb[0].mxu0
    %v2063 = vadd.f32 0.0, %v2062
    %v2064 = vpop.f32.mrb[0].mxu0
    %2065 = vmatprep.mubr.f32.mxu0 0.0
    %2066 = vmatmul.mubr.f32.gmra.mrb[0].mxu0 %v1928
    %v2067 = vpop.f32.mrb[0].mxu0
    %v2068 = vadd.f32 0.0, %v2067
    %v2069 = vpop.f32.mrb[0].mxu0
    %2070 = vmatprep.mubr.f32.mxu0 0.0
    %2071 = vmatmul.mubr.f32.gmra.mrb[0].mxu0 %v1931
    %v2072 = vpop.f32.mrb[0].mxu0
    %v2073 = vadd.f32 0.0, %v2072
    %v2074 = vpop.f32.mrb[0].mxu0
    %2075 = vmatprep.mubr.f32.mxu0 0.0
    %2076 = vmatmul.mubr.f32.gmra.mrb[0].mxu0 %v1934
    %v2077 = vpop.f32.mrb[0].mxu0
    %v2078 = vadd.f32 0.0, %v2077
    %v2079 = vpop.f32.mrb[0].mxu0
    %2080 = vdwg.mxu0
    %v2081 = vadd.f32 %v1789, %v2003
    %v2082 = vadd.f32 %v1794, %v2008
    %v2083 = vadd.f32 %v1799, %v2013
    %v2084 = vadd.f32 %v1804, %v2018
    %v2085 = vadd.f32 %v1809, %v2023
    %v2086 = vadd.f32 %v1814, %v2028
    %v2087 = vadd.f32 %v1819, %v2033
    %v2088 = vadd.f32 %v1824, %v2038
    %v2089 = vadd.f32 %v1829, %v2043
    %v2090 = vadd.f32 %v1834, %v2048
    %v2091 = vadd.f32 %v1839, %v2053
    %v2092 = vadd.f32 %v1844, %v2058
    %v2093 = vadd.f32 %v1849, %v2063
    %v2094 = vadd.f32 %v1854, %v2068
    %v2095 = vadd.f32 %v1859, %v2073
    %v2096 = vadd.f32 %v1864, %v2078
    %v2097 = vld [vmem:[#allocation2 + $0x1] sm:$0xff]
    %v2098 = vld [vmem:[#allocation2 + $0x11] sm:$0xff]
    %v2099 = vld [vmem:[#allocation2 + $0x21] sm:$0xff]
    %v2100 = vld [vmem:[#allocation2 + $0x31] sm:$0xff]
    %v2101 = vld [vmem:[#allocation2 + $0x41] sm:$0xff]
    %v2102 = vld [vmem:[#allocation2 + $0x51] sm:$0xff]
    %v2103 = vld [vmem:[#allocation2 + $0x61] sm:$0xff]
    %v2104 = vld [vmem:[#allocation2 + $0x71] sm:$0xff]
    %v2105 = vld [vmem:[#allocation2 + $0x81] sm:$0xff]
    %v2106 = vld [vmem:[#allocation2 + $0x91] sm:$0xff]
    %v2107 = vld [vmem:[#allocation2 + $0xa1] sm:$0xff]
    %v2108 = vld [vmem:[#allocation2 + $0xb1] sm:$0xff]
    %v2109 = vld [vmem:[#allocation2 + $0xc1] sm:$0xff]
    %v2110 = vld [vmem:[#allocation2 + $0xd1] sm:$0xff]
    %v2111 = vld [vmem:[#allocation2 + $0xe1] sm:$0xff]
    %v2112 = vld [vmem:[#allocation2 + $0xf1] sm:$0xff]
    %s2113 = scalar_lea.vmem [#allocation7], 96
    %v2114 = vld [vmem:[%s2113] sm:$0xff]
    %v2115 = vld [vmem:[%s2113 + $0x8] sm:$0xff]
    %v2116 = vld [vmem:[%s2113 + $0x10] sm:$0xff]
    %v2117 = vld [vmem:[%s2113 + $0x18] sm:$0xff]
    %v2119 = vsel %vm67, %v2097, 0
    %v2122 = vsel %vm67, %v2098, 0
    %v2125 = vsel %vm67, %v2099, 0
    %v2128 = vsel %vm67, %v2100, 0
    %v2131 = vsel %vm67, %v2101, 0
    %v2134 = vsel %vm67, %v2102, 0
    %v2137 = vsel %vm67, %v2103, 0
    %v2140 = vsel %vm67, %v2104, 0
    %v2143 = vsel %vm67, %v2105, 0
    %v2146 = vsel %vm67, %v2106, 0
    %v2149 = vsel %vm67, %v2107, 0
    %v2152 = vsel %vm67, %v2108, 0
    %v2155 = vsel %vm67, %v2109, 0
    %v2158 = vsel %vm67, %v2110, 0
    %v2161 = vsel %vm67, %v2111, 0
    %v2164 = vsel %vm67, %v2112, 0
    %2166 = vmatprep.subr.mxu0 0.0
    %2167 = vmatpush1.msra.mxu0 %v2114
    %2168 = vmatprep.subr.mxu0 0.0
    %2169 = vmatpush1.msra.mxu0 %v2115
    %2170 = vmatprep.subr.mxu0 0.0
    %2171 = vmatpush1.msra.mxu0 %v2116
    %2172 = vmatprep.subr.mxu0 0.0
    %2173 = vmatpush1.msra.mxu0 %v2117
    %2174 = vmatprep.subr.mxu0 0.0
    %2175 = vmatpush1.msra.mxu0 0.0
    %2176 = vmatprep.subr.mxu0 0.0
    %2177 = vmatpush1.msra.mxu0 0.0
    %2178 = vmatprep.subr.mxu0 0.0
    %2179 = vmatpush1.msra.mxu0 0.0
    %2180 = vmatprep.subr.mxu0 0.0
    %2181 = vmatpush1.msra.mxu0 0.0
    %2182 = vmatprep.subr.mxu0 0.0
    %2183 = vmatpush1.msra.mxu0 0.0
    %2184 = vmatprep.subr.mxu0 0.0
    %2185 = vmatpush1.msra.mxu0 0.0
    %2186 = vmatprep.subr.mxu0 0.0
    %2187 = vmatpush1.msra.mxu0 0.0
    %2188 = vmatprep.subr.mxu0 0.0
    %2189 = vmatpush1.msra.mxu0 0.0
    %2190 = vmatprep.subr.mxu0 0.0
    %2191 = vmatpush1.msra.mxu0 0.0
    %2192 = vmatprep.subr.mxu0 0.0
    %2193 = vmatpush1.msra.mxu0 0.0
    %2194 = vmatprep.subr.mxu0 0.0
    %2195 = vmatpush1.msra.mxu0 0.0
    %2196 = vmatprep.subr.mxu0 0.0
    %2197 = vmatpush1.msra.mxu0 0.0
    %2198 = vmatprep.subr.mxu0 0.0
    %2199 = vmatpush1.msra.mxu0 0.0
    %2200 = vmatprep.subr.mxu0 0.0
    %2201 = vmatpush1.msra.mxu0 0.0
    %2202 = vmatprep.subr.mxu0 0.0
    %2203 = vmatpush1.msra.mxu0 0.0
    %2204 = vmatprep.subr.mxu0 0.0
    %2205 = vmatpush1.msra.mxu0 0.0
    %2206 = vmatprep.subr.mxu0 0.0
    %2207 = vmatpush1.msra.mxu0 0.0
    %2208 = vmatprep.subr.mxu0 0.0
    %2209 = vmatpush1.msra.mxu0 0.0
    %2210 = vmatprep.subr.mxu0 0.0
    %2211 = vmatpush1.msra.mxu0 0.0
    %2212 = vmatprep.subr.mxu0 0.0
    %2213 = vmatpush1.msra.mxu0 0.0
    %2214 = vmatprep.subr.mxu0 0.0
    %2215 = vmatpush1.msra.mxu0 0.0
    %2216 = vmatprep.subr.mxu0 0.0
    %2217 = vmatpush1.msra.mxu0 0.0
    %2218 = vmatprep.subr.mxu0 0.0
    %2219 = vmatpush1.msra.mxu0 0.0
    %2220 = vmatprep.subr.mxu0 0.0
    %2221 = vmatpush1.msra.mxu0 0.0
    %2222 = vmatprep.subr.mxu0 0.0
    %2223 = vmatpush1.msra.mxu0 0.0
    %2224 = vmatprep.subr.mxu0 0.0
    %2225 = vmatpush1.msra.mxu0 0.0
    %2226 = vmatprep.subr.mxu0 0.0
    %2227 = vmatpush1.msra.mxu0 0.0
    %2228 = vmatprep.subr.mxu0 0.0
    %2229 = vmatpush1.msra.mxu0 0.0
    %2230 = vmatprep.mubr.f32.mxu0 0.0
    %2231 = vmatmul.mubr.f32.gmra.mrb[0].mxu0 %v2119
    %v2232 = vpop.f32.mrb[0].mxu0
    %v2233 = vadd.f32 0.0, %v2232
    %v2234 = vpop.f32.mrb[0].mxu0
    %2235 = vmatprep.mubr.f32.mxu0 0.0
    %2236 = vmatmul.mubr.f32.gmra.mrb[0].mxu0 %v2122
    %v2237 = vpop.f32.mrb[0].mxu0
    %v2238 = vadd.f32 0.0, %v2237
    %v2239 = vpop.f32.mrb[0].mxu0
    %2240 = vmatprep.mubr.f32.mxu0 0.0
    %2241 = vmatmul.mubr.f32.gmra.mrb[0].mxu0 %v2125
    %v2242 = vpop.f32.mrb[0].mxu0
    %v2243 = vadd.f32 0.0, %v2242
    %v2244 = vpop.f32.mrb[0].mxu0
    %2245 = vmatprep.mubr.f32.mxu0 0.0
    %2246 = vmatmul.mubr.f32.gmra.mrb[0].mxu0 %v2128
    %v2247 = vpop.f32.mrb[0].mxu0
    %v2248 = vadd.f32 0.0, %v2247
    %v2249 = vpop.f32.mrb[0].mxu0
    %2250 = vmatprep.mubr.f32.mxu0 0.0
    %2251 = vmatmul.mubr.f32.gmra.mrb[0].mxu0 %v2131
    %v2252 = vpop.f32.mrb[0].mxu0
    %v2253 = vadd.f32 0.0, %v2252
    %v2254 = vpop.f32.mrb[0].mxu0
    %2255 = vmatprep.mubr.f32.mxu0 0.0
    %2256 = vmatmul.mubr.f32.gmra.mrb[0].mxu0 %v2134
    %v2257 = vpop.f32.mrb[0].mxu0
    %v2258 = vadd.f32 0.0, %v2257
    %v2259 = vpop.f32.mrb[0].mxu0
    %2260 = vmatprep.mubr.f32.mxu0 0.0
    %2261 = vmatmul.mubr.f32.gmra.mrb[0].mxu0 %v2137
    %v2262 = vpop.f32.mrb[0].mxu0
    %v2263 = vadd.f32 0.0, %v2262
    %v2264 = vpop.f32.mrb[0].mxu0
    %2265 = vmatprep.mubr.f32.mxu0 0.0
    %2266 = vmatmul.mubr.f32.gmra.mrb[0].mxu0 %v2140
    %v2267 = vpop.f32.mrb[0].mxu0
    %v2268 = vadd.f32 0.0, %v2267
    %v2269 = vpop.f32.mrb[0].mxu0
    %2270 = vmatprep.mubr.f32.mxu0 0.0
    %2271 = vmatmul.mubr.f32.gmra.mrb[0].mxu0 %v2143
    %v2272 = vpop.f32.mrb[0].mxu0
    %v2273 = vadd.f32 0.0, %v2272
    %v2274 = vpop.f32.mrb[0].mxu0
    %2275 = vmatprep.mubr.f32.mxu0 0.0
    %2276 = vmatmul.mubr.f32.gmra.mrb[0].mxu0 %v2146
    %v2277 = vpop.f32.mrb[0].mxu0
    %v2278 = vadd.f32 0.0, %v2277
    %v2279 = vpop.f32.mrb[0].mxu0
    %2280 = vmatprep.mubr.f32.mxu0 0.0
    %2281 = vmatmul.mubr.f32.gmra.mrb[0].mxu0 %v2149
    %v2282 = vpop.f32.mrb[0].mxu0
    %v2283 = vadd.f32 0.0, %v2282
    %v2284 = vpop.f32.mrb[0].mxu0
    %2285 = vmatprep.mubr.f32.mxu0 0.0
    %2286 = vmatmul.mubr.f32.gmra.mrb[0].mxu0 %v2152
    %v2287 = vpop.f32.mrb[0].mxu0
    %v2288 = vadd.f32 0.0, %v2287
    %v2289 = vpop.f32.mrb[0].mxu0
    %2290 = vmatprep.mubr.f32.mxu0 0.0
    %2291 = vmatmul.mubr.f32.gmra.mrb[0].mxu0 %v2155
    %v2292 = vpop.f32.mrb[0].mxu0
    %v2293 = vadd.f32 0.0, %v2292
    %v2294 = vpop.f32.mrb[0].mxu0
    %2295 = vmatprep.mubr.f32.mxu0 0.0
    %2296 = vmatmul.mubr.f32.gmra.mrb[0].mxu0 %v2158
    %v2297 = vpop.f32.mrb[0].mxu0
    %v2298 = vadd.f32 0.0, %v2297
    %v2299 = vpop.f32.mrb[0].mxu0
    %2300 = vmatprep.mubr.f32.mxu0 0.0
    %2301 = vmatmul.mubr.f32.gmra.mrb[0].mxu0 %v2161
    %v2302 = vpop.f32.mrb[0].mxu0
    %v2303 = vadd.f32 0.0, %v2302
    %v2304 = vpop.f32.mrb[0].mxu0
    %2305 = vmatprep.mubr.f32.mxu0 0.0
    %2306 = vmatmul.mubr.f32.gmra.mrb[0].mxu0 %v2164
    %v2307 = vpop.f32.mrb[0].mxu0
    %v2308 = vadd.f32 0.0, %v2307
    %v2309 = vpop.f32.mrb[0].mxu0
    %2310 = vdwg.mxu0
    %v2311 = vadd.f32 %v2081, %v2233
    %v2312 = vadd.f32 %v2082, %v2238
    %v2313 = vadd.f32 %v2083, %v2243
    %v2314 = vadd.f32 %v2084, %v2248
    %v2315 = vadd.f32 %v2085, %v2253
    %v2316 = vadd.f32 %v2086, %v2258
    %v2317 = vadd.f32 %v2087, %v2263
    %v2318 = vadd.f32 %v2088, %v2268
    %v2319 = vadd.f32 %v2089, %v2273
    %v2320 = vadd.f32 %v2090, %v2278
    %v2321 = vadd.f32 %v2091, %v2283
    %v2322 = vadd.f32 %v2092, %v2288
    %v2323 = vadd.f32 %v2093, %v2293
    %v2324 = vadd.f32 %v2094, %v2298
    %v2325 = vadd.f32 %v2095, %v2303
    %v2326 = vadd.f32 %v2096, %v2308
    %v2327 = vld [vmem:[%s78 + $0x1] sm:$0xff]
    %v2328 = vld [vmem:[%s78 + $0x11] sm:$0xff]
    %v2329 = vld [vmem:[%s78 + $0x21] sm:$0xff]
    %v2330 = vld [vmem:[%s78 + $0x31] sm:$0xff]
    %v2331 = vld [vmem:[%s78 + $0x41] sm:$0xff]
    %v2332 = vld [vmem:[%s78 + $0x51] sm:$0xff]
    %v2333 = vld [vmem:[%s78 + $0x61] sm:$0xff]
    %v2334 = vld [vmem:[%s78 + $0x71] sm:$0xff]
    %v2335 = vld [vmem:[%s78 + $0x81] sm:$0xff]
    %v2336 = vld [vmem:[%s78 + $0x91] sm:$0xff]
    %v2337 = vld [vmem:[%s78 + $0xa1] sm:$0xff]
    %v2338 = vld [vmem:[%s78 + $0xb1] sm:$0xff]
    %v2339 = vld [vmem:[%s78 + $0xc1] sm:$0xff]
    %v2340 = vld [vmem:[%s78 + $0xd1] sm:$0xff]
    %v2341 = vld [vmem:[%s78 + $0xe1] sm:$0xff]
    %v2342 = vld [vmem:[%s78 + $0xf1] sm:$0xff]
    %s2343 = scalar_lea.vmem [#allocation7], 128
    %v2344 = vld [vmem:[%s2343] sm:$0xff]
    %v2345 = vld [vmem:[%s2343 + $0x8] sm:$0xff]
    %v2346 = vld [vmem:[%s2343 + $0x10] sm:$0xff]
    %v2347 = vld [vmem:[%s2343 + $0x18] sm:$0xff]
    %v2349 = vsel %vm67, %v2327, 0
    %v2352 = vsel %vm67, %v2328, 0
    %v2355 = vsel %vm67, %v2329, 0
    %v2358 = vsel %vm67, %v2330, 0
    %v2361 = vsel %vm67, %v2331, 0
    %v2364 = vsel %vm67, %v2332, 0
    %v2367 = vsel %vm67, %v2333, 0
    %v2370 = vsel %vm67, %v2334, 0
    %v2373 = vsel %vm67, %v2335, 0
    %v2376 = vsel %vm67, %v2336, 0
    %v2379 = vsel %vm67, %v2337, 0
    %v2382 = vsel %vm67, %v2338, 0
    %v2385 = vsel %vm67, %v2339, 0
    %v2388 = vsel %vm67, %v2340, 0
    %v2391 = vsel %vm67, %v2341, 0
    %v2394 = vsel %vm67, %v2342, 0
    %2396 = vmatprep.subr.mxu0 0.0
    %2397 = vmatpush1.msra.mxu0 %v2344
    %2398 = vmatprep.subr.mxu0 0.0
    %2399 = vmatpush1.msra.mxu0 %v2345
    %2400 = vmatprep.subr.mxu0 0.0
    %2401 = vmatpush1.msra.mxu0 %v2346
    %2402 = vmatprep.subr.mxu0 0.0
    %2403 = vmatpush1.msra.mxu0 %v2347
    %2404 = vmatprep.subr.mxu0 0.0
    %2405 = vmatpush1.msra.mxu0 0.0
    %2406 = vmatprep.subr.mxu0 0.0
    %2407 = vmatpush1.msra.mxu0 0.0
    %2408 = vmatprep.subr.mxu0 0.0
    %2409 = vmatpush1.msra.mxu0 0.0
    %2410 = vmatprep.subr.mxu0 0.0
    %2411 = vmatpush1.msra.mxu0 0.0
    %2412 = vmatprep.subr.mxu0 0.0
    %2413 = vmatpush1.msra.mxu0 0.0
    %2414 = vmatprep.subr.mxu0 0.0
    %2415 = vmatpush1.msra.mxu0 0.0
    %2416 = vmatprep.subr.mxu0 0.0
    %2417 = vmatpush1.msra.mxu0 0.0
    %2418 = vmatprep.subr.mxu0 0.0
    %2419 = vmatpush1.msra.mxu0 0.0
    %2420 = vmatprep.subr.mxu0 0.0
    %2421 = vmatpush1.msra.mxu0 0.0
    %2422 = vmatprep.subr.mxu0 0.0
    %2423 = vmatpush1.msra.mxu0 0.0
    %2424 = vmatprep.subr.mxu0 0.0
    %2425 = vmatpush1.msra.mxu0 0.0
    %2426 = vmatprep.subr.mxu0 0.0
    %2427 = vmatpush1.msra.mxu0 0.0
    %2428 = vmatprep.subr.mxu0 0.0
    %2429 = vmatpush1.msra.mxu0 0.0
    %2430 = vmatprep.subr.mxu0 0.0
    %2431 = vmatpush1.msra.mxu0 0.0
    %2432 = vmatprep.subr.mxu0 0.0
    %2433 = vmatpush1.msra.mxu0 0.0
    %2434 = vmatprep.subr.mxu0 0.0
    %2435 = vmatpush1.msra.mxu0 0.0
    %2436 = vmatprep.subr.mxu0 0.0
    %2437 = vmatpush1.msra.mxu0 0.0
    %2438 = vmatprep.subr.mxu0 0.0
    %2439 = vmatpush1.msra.mxu0 0.0
    %2440 = vmatprep.subr.mxu0 0.0
    %2441 = vmatpush1.msra.mxu0 0.0
    %2442 = vmatprep.subr.mxu0 0.0
    %2443 = vmatpush1.msra.mxu0 0.0
    %2444 = vmatprep.subr.mxu0 0.0
    %2445 = vmatpush1.msra.mxu0 0.0
    %2446 = vmatprep.subr.mxu0 0.0
    %2447 = vmatpush1.msra.mxu0 0.0
    %2448 = vmatprep.subr.mxu0 0.0
    %2449 = vmatpush1.msra.mxu0 0.0
    %2450 = vmatprep.subr.mxu0 0.0
    %2451 = vmatpush1.msra.mxu0 0.0
    %2452 = vmatprep.subr.mxu0 0.0
    %2453 = vmatpush1.msra.mxu0 0.0
    %2454 = vmatprep.subr.mxu0 0.0
    %2455 = vmatpush1.msra.mxu0 0.0
    %2456 = vmatprep.subr.mxu0 0.0
    %2457 = vmatpush1.msra.mxu0 0.0
    %2458 = vmatprep.subr.mxu0 0.0
    %2459 = vmatpush1.msra.mxu0 0.0
    %2460 = vmatprep.mubr.f32.mxu0 0.0
    %2461 = vmatmul.mubr.f32.gmra.mrb[0].mxu0 %v2349
    %v2462 = vpop.f32.mrb[0].mxu0
    %v2463 = vadd.f32 0.0, %v2462
    %v2464 = vpop.f32.mrb[0].mxu0
    %2465 = vmatprep.mubr.f32.mxu0 0.0
    %2466 = vmatmul.mubr.f32.gmra.mrb[0].mxu0 %v2352
    %v2467 = vpop.f32.mrb[0].mxu0
    %v2468 = vadd.f32 0.0, %v2467
    %v2469 = vpop.f32.mrb[0].mxu0
    %2470 = vmatprep.mubr.f32.mxu0 0.0
    %2471 = vmatmul.mubr.f32.gmra.mrb[0].mxu0 %v2355
    %v2472 = vpop.f32.mrb[0].mxu0
    %v2473 = vadd.f32 0.0, %v2472
    %v2474 = vpop.f32.mrb[0].mxu0
    %2475 = vmatprep.mubr.f32.mxu0 0.0
    %2476 = vmatmul.mubr.f32.gmra.mrb[0].mxu0 %v2358
    %v2477 = vpop.f32.mrb[0].mxu0
    %v2478 = vadd.f32 0.0, %v2477
    %v2479 = vpop.f32.mrb[0].mxu0
    %2480 = vmatprep.mubr.f32.mxu0 0.0
    %2481 = vmatmul.mubr.f32.gmra.mrb[0].mxu0 %v2361
    %v2482 = vpop.f32.mrb[0].mxu0
    %v2483 = vadd.f32 0.0, %v2482
    %v2484 = vpop.f32.mrb[0].mxu0
    %2485 = vmatprep.mubr.f32.mxu0 0.0
    %2486 = vmatmul.mubr.f32.gmra.mrb[0].mxu0 %v2364
    %v2487 = vpop.f32.mrb[0].mxu0
    %v2488 = vadd.f32 0.0, %v2487
    %v2489 = vpop.f32.mrb[0].mxu0
    %2490 = vmatprep.mubr.f32.mxu0 0.0
    %2491 = vmatmul.mubr.f32.gmra.mrb[0].mxu0 %v2367
    %v2492 = vpop.f32.mrb[0].mxu0
    %v2493 = vadd.f32 0.0, %v2492
    %v2494 = vpop.f32.mrb[0].mxu0
    %2495 = vmatprep.mubr.f32.mxu0 0.0
    %2496 = vmatmul.mubr.f32.gmra.mrb[0].mxu0 %v2370
    %v2497 = vpop.f32.mrb[0].mxu0
    %v2498 = vadd.f32 0.0, %v2497
    %v2499 = vpop.f32.mrb[0].mxu0
    %2500 = vmatprep.mubr.f32.mxu0 0.0
    %2501 = vmatmul.mubr.f32.gmra.mrb[0].mxu0 %v2373
    %v2502 = vpop.f32.mrb[0].mxu0
    %v2503 = vadd.f32 0.0, %v2502
    %v2504 = vpop.f32.mrb[0].mxu0
    %2505 = vmatprep.mubr.f32.mxu0 0.0
    %2506 = vmatmul.mubr.f32.gmra.mrb[0].mxu0 %v2376
    %v2507 = vpop.f32.mrb[0].mxu0
    %v2508 = vadd.f32 0.0, %v2507
    %v2509 = vpop.f32.mrb[0].mxu0
    %2510 = vmatprep.mubr.f32.mxu0 0.0
    %2511 = vmatmul.mubr.f32.gmra.mrb[0].mxu0 %v2379
    %v2512 = vpop.f32.mrb[0].mxu0
    %v2513 = vadd.f32 0.0, %v2512
    %v2514 = vpop.f32.mrb[0].mxu0
    %2515 = vmatprep.mubr.f32.mxu0 0.0
    %2516 = vmatmul.mubr.f32.gmra.mrb[0].mxu0 %v2382
    %v2517 = vpop.f32.mrb[0].mxu0
    %v2518 = vadd.f32 0.0, %v2517
    %v2519 = vpop.f32.mrb[0].mxu0
    %2520 = vmatprep.mubr.f32.mxu0 0.0
    %2521 = vmatmul.mubr.f32.gmra.mrb[0].mxu0 %v2385
    %v2522 = vpop.f32.mrb[0].mxu0
    %v2523 = vadd.f32 0.0, %v2522
    %v2524 = vpop.f32.mrb[0].mxu0
    %2525 = vmatprep.mubr.f32.mxu0 0.0
    %2526 = vmatmul.mubr.f32.gmra.mrb[0].mxu0 %v2388
    %v2527 = vpop.f32.mrb[0].mxu0
    %v2528 = vadd.f32 0.0, %v2527
    %v2529 = vpop.f32.mrb[0].mxu0
    %2530 = vmatprep.mubr.f32.mxu0 0.0
    %2531 = vmatmul.mubr.f32.gmra.mrb[0].mxu0 %v2391
    %v2532 = vpop.f32.mrb[0].mxu0
    %v2533 = vadd.f32 0.0, %v2532
    %v2534 = vpop.f32.mrb[0].mxu0
    %2535 = vmatprep.mubr.f32.mxu0 0.0
    %2536 = vmatmul.mubr.f32.gmra.mrb[0].mxu0 %v2394
    %v2537 = vpop.f32.mrb[0].mxu0
    %v2538 = vadd.f32 0.0, %v2537
    %v2539 = vpop.f32.mrb[0].mxu0
    %2540 = vdwg.mxu0
    %v2541 = vadd.f32 %v2311, %v2463
    %v2542 = vadd.f32 %v2312, %v2468
    %v2543 = vadd.f32 %v2313, %v2473
    %v2544 = vadd.f32 %v2314, %v2478
    %v2545 = vadd.f32 %v2315, %v2483
    %v2546 = vadd.f32 %v2316, %v2488
    %v2547 = vadd.f32 %v2317, %v2493
    %v2548 = vadd.f32 %v2318, %v2498
    %v2549 = vadd.f32 %v2319, %v2503
    %v2550 = vadd.f32 %v2320, %v2508
    %v2551 = vadd.f32 %v2321, %v2513
    %v2552 = vadd.f32 %v2322, %v2518
    %v2553 = vadd.f32 %v2323, %v2523
    %v2554 = vadd.f32 %v2324, %v2528
    %v2555 = vadd.f32 %v2325, %v2533
    %v2556 = vadd.f32 %v2326, %v2538
    %v2557 = vadd.f32 %v2541, %v112
    %v2558 = vadd.f32 %v2542, %v113
    %v2559 = vadd.f32 %v2543, %v114
    %v2560 = vadd.f32 %v2544, %v115
    %v2561 = vadd.f32 %v2545, %v116
    %v2562 = vadd.f32 %v2546, %v117
    %v2563 = vadd.f32 %v2547, %v118
    %v2564 = vadd.f32 %v2548, %v119
    %v2565 = vadd.f32 %v2549, %v120
    %v2566 = vadd.f32 %v2550, %v121
    %v2567 = vadd.f32 %v2551, %v122
    %v2568 = vadd.f32 %v2552, %v123
    %v2569 = vadd.f32 %v2553, %v124
    %v2570 = vadd.f32 %v2554, %v125
    %v2571 = vadd.f32 %v2555, %v126
    %v2572 = vadd.f32 %v2556, %v127
    %v2573 = vmax.f32 %v2557, 0.0
    %v2574 = vmax.f32 %v2558, 0.0
    %v2575 = vmax.f32 %v2559, 0.0
    %v2576 = vmax.f32 %v2560, 0.0
    %v2577 = vmax.f32 %v2561, 0.0
    %v2578 = vmax.f32 %v2562, 0.0
    %v2579 = vmax.f32 %v2563, 0.0
    %v2580 = vmax.f32 %v2564, 0.0
    %v2581 = vmax.f32 %v2565, 0.0
    %v2582 = vmax.f32 %v2566, 0.0
    %v2583 = vmax.f32 %v2567, 0.0
    %v2584 = vmax.f32 %v2568, 0.0
    %v2585 = vmax.f32 %v2569, 0.0
    %v2586 = vmax.f32 %v2570, 0.0
    %v2587 = vmax.f32 %v2571, 0.0
    %v2588 = vmax.f32 %v2572, 0.0
    %v2589 = vsel %vm67, %v2573, 0.0
    %v2590 = vsel %vm67, %v2574, 0.0
    %v2591 = vadd.f32 %v2589, %v2590
    %v2592 = vsel %vm67, %v2575, 0.0
    %v2593 = vadd.f32 %v2591, %v2592
    %v2594 = vsel %vm67, %v2576, 0.0
    %v2595 = vadd.f32 %v2593, %v2594
    %v2596 = vsel %vm67, %v2577, 0.0
    %v2597 = vadd.f32 %v2595, %v2596
    %v2598 = vsel %vm67, %v2578, 0.0
    %v2599 = vadd.f32 %v2597, %v2598
    %v2600 = vsel %vm67, %v2579, 0.0
    %v2601 = vadd.f32 %v2599, %v2600
    %v2602 = vsel %vm67, %v2580, 0.0
    %v2603 = vadd.f32 %v2601, %v2602
    %v2604 = vsel %vm67, %v2581, 0.0
    %v2605 = vadd.f32 %v2603, %v2604
    %v2606 = vsel %vm67, %v2582, 0.0
    %v2607 = vadd.f32 %v2605, %v2606
    %v2608 = vsel %vm67, %v2583, 0.0
    %v2609 = vadd.f32 %v2607, %v2608
    %v2610 = vsel %vm67, %v2584, 0.0
    %v2611 = vadd.f32 %v2609, %v2610
    %v2612 = vsel %vm67, %v2585, 0.0
    %v2613 = vadd.f32 %v2611, %v2612
    %v2614 = vsel %vm67, %v2586, 0.0
    %v2615 = vadd.f32 %v2613, %v2614
    %v2616 = vsel %vm67, %v2587, 0.0
    %v2617 = vadd.f32 %v2615, %v2616
    %v2618 = vsel %vm67, %v2588, 0.0
    %v2619 = vadd.f32 %v2617, %v2618
    %v2620 = vrot.slane %v2619, 4
    %v2621 = vadd.f32 %v2619, %v2620
    %v2622 = vrot.slane %v2621, 2
    %v2623 = vadd.f32 %v2621, %v2622
    %v2624 = vrot.slane %v2623, 1
    %v2625 = vadd.f32 %v2623, %v2624
    %v2626 = vmul.f32 %v2573, %v2573
    %v2627 = vmul.f32 %v2574, %v2574
    %v2628 = vmul.f32 %v2575, %v2575
    %v2629 = vmul.f32 %v2576, %v2576
    %v2630 = vmul.f32 %v2577, %v2577
    %v2631 = vmul.f32 %v2578, %v2578
    %v2632 = vmul.f32 %v2579, %v2579
    %v2633 = vmul.f32 %v2580, %v2580
    %v2634 = vmul.f32 %v2581, %v2581
    %v2635 = vmul.f32 %v2582, %v2582
    %v2636 = vmul.f32 %v2583, %v2583
    %v2637 = vmul.f32 %v2584, %v2584
    %v2638 = vmul.f32 %v2585, %v2585
    %v2639 = vmul.f32 %v2586, %v2586
    %v2640 = vmul.f32 %v2587, %v2587
    %v2641 = vmul.f32 %v2588, %v2588
    %v2642 = vsel %vm67, %v2626, 0.0
    %v2643 = vsel %vm67, %v2627, 0.0
    %v2644 = vadd.f32 %v2642, %v2643
    %v2645 = vsel %vm67, %v2628, 0.0
    %v2646 = vadd.f32 %v2644, %v2645
    %v2647 = vsel %vm67, %v2629, 0.0
    %v2648 = vadd.f32 %v2646, %v2647
    %v2649 = vsel %vm67, %v2630, 0.0
    %v2650 = vadd.f32 %v2648, %v2649
    %v2651 = vsel %vm67, %v2631, 0.0
    %v2652 = vadd.f32 %v2650, %v2651
    %v2653 = vsel %vm67, %v2632, 0.0
    %v2654 = vadd.f32 %v2652, %v2653
    %v2655 = vsel %vm67, %v2633, 0.0
    %v2656 = vadd.f32 %v2654, %v2655
    %v2657 = vsel %vm67, %v2634, 0.0
    %v2658 = vadd.f32 %v2656, %v2657
    %v2659 = vsel %vm67, %v2635, 0.0
    %v2660 = vadd.f32 %v2658, %v2659
    %v2661 = vsel %vm67, %v2636, 0.0
    %v2662 = vadd.f32 %v2660, %v2661
    %v2663 = vsel %vm67, %v2637, 0.0
    %v2664 = vadd.f32 %v2662, %v2663
    %v2665 = vsel %vm67, %v2638, 0.0
    %v2666 = vadd.f32 %v2664, %v2665
    %v2667 = vsel %vm67, %v2639, 0.0
    %v2668 = vadd.f32 %v2666, %v2667
    %v2669 = vsel %vm67, %v2640, 0.0
    %v2670 = vadd.f32 %v2668, %v2669
    %v2671 = vsel %vm67, %v2641, 0.0
    %v2672 = vadd.f32 %v2670, %v2671
    %v2673 = vrot.slane %v2672, 4
    %v2674 = vadd.f32 %v2672, %v2673
    %v2675 = vrot.slane %v2674, 2
    %v2676 = vadd.f32 %v2674, %v2675
    %v2677 = vrot.slane %v2676, 1
    %v2678 = vadd.f32 %v2676, %v2677
    %v2679 = vmul.f32 %v2625, 0.0078125
    %v2680 = vmul.f32 %v2678, 0.0078125
    %v2681 = vmul.f32 %v2679, %v2679
    %v2682 = vsub.f32 %v2680, %v2681
    %v2683 = vmax.f32 %v2682, 0.0
    %v2684 = vadd.f32 %v2683, 1e-05
    %v2685 = vrsqrt.pop %v2684
    %v2686 = vld [vmem:[%s5] sm:$0x1]
    %v2687 = vmul.f32 %v2686, %v2685
    %v2688 = vld [vmem:[%s6] sm:$0x1]
    %v2689 = vmul.f32 %v2679, %v2687
    %v2690 = vsub.f32 %v2688, %v2689
    %v2692 = vlaneseq
    %v2693 = vshrl.u32 %v2692, 7
    %v2694 = vsub.s32 0, %v2693
    %v2695 = vrot.slane %v2687, %v2694
    %v2697 = vmul.f32 %v2573, %v2695
    %v2698 = vmul.f32 %v2574, %v2695
    %v2699 = vmul.f32 %v2575, %v2695
    %v2700 = vmul.f32 %v2576, %v2695
    %v2701 = vmul.f32 %v2577, %v2695
    %v2702 = vmul.f32 %v2578, %v2695
    %v2703 = vmul.f32 %v2579, %v2695
    %v2704 = vmul.f32 %v2580, %v2695
    %v2705 = vmul.f32 %v2581, %v2695
    %v2706 = vmul.f32 %v2582, %v2695
    %v2707 = vmul.f32 %v2583, %v2695
    %v2708 = vmul.f32 %v2584, %v2695
    %v2709 = vmul.f32 %v2585, %v2695
    %v2710 = vmul.f32 %v2586, %v2695
    %v2711 = vmul.f32 %v2587, %v2695
    %v2712 = vmul.f32 %v2588, %v2695
    %v2714 = vlaneseq
    %v2715 = vshrl.u32 %v2714, 7
    %v2716 = vsub.s32 0, %v2715
    %v2717 = vrot.slane %v2690, %v2716
    %v2719 = vadd.f32 %v2697, %v2717
    %v2720 = vadd.f32 %v2698, %v2717
    %v2721 = vadd.f32 %v2699, %v2717
    %v2722 = vadd.f32 %v2700, %v2717
    %v2723 = vadd.f32 %v2701, %v2717
    %v2724 = vadd.f32 %v2702, %v2717
    %v2725 = vadd.f32 %v2703, %v2717
    %v2726 = vadd.f32 %v2704, %v2717
    %v2727 = vadd.f32 %v2705, %v2717
    %v2728 = vadd.f32 %v2706, %v2717
    %v2729 = vadd.f32 %v2707, %v2717
    %v2730 = vadd.f32 %v2708, %v2717
    %v2731 = vadd.f32 %v2709, %v2717
    %v2732 = vadd.f32 %v2710, %v2717
    %v2733 = vadd.f32 %v2711, %v2717
    %v2734 = vadd.f32 %v2712, %v2717
    %2735 = vst.msk [vmem:[%s7] sm:$0xff] %vm67, %v2719
    %2736 = vst.msk [vmem:[%s7 + $0x8] sm:$0xff] %vm67, %v2720
    %2737 = vst.msk [vmem:[%s7 + $0x10] sm:$0xff] %vm67, %v2721
    %2738 = vst.msk [vmem:[%s7 + $0x18] sm:$0xff] %vm67, %v2722
    %2739 = vst.msk [vmem:[%s7 + $0x20] sm:$0xff] %vm67, %v2723
    %2740 = vst.msk [vmem:[%s7 + $0x28] sm:$0xff] %vm67, %v2724
    %2741 = vst.msk [vmem:[%s7 + $0x30] sm:$0xff] %vm67, %v2725
    %2742 = vst.msk [vmem:[%s7 + $0x38] sm:$0xff] %vm67, %v2726
    %2743 = vst.msk [vmem:[%s7 + $0x40] sm:$0xff] %vm67, %v2727
    %2744 = vst.msk [vmem:[%s7 + $0x48] sm:$0xff] %vm67, %v2728
    %2745 = vst.msk [vmem:[%s7 + $0x50] sm:$0xff] %vm67, %v2729
    %2746 = vst.msk [vmem:[%s7 + $0x58] sm:$0xff] %vm67, %v2730
    %2747 = vst.msk [vmem:[%s7 + $0x60] sm:$0xff] %vm67, %v2731
    %2748 = vst.msk [vmem:[%s7 + $0x68] sm:$0xff] %vm67, %v2732
    %2749 = vst.msk [vmem:[%s7 + $0x70] sm:$0xff] %vm67, %v2733
    %2750 = vst.msk [vmem:[%s7 + $0x78] sm:$0xff] %vm67, %v2734
    // Predicated region
    $region42: #{tpu_custom_call.1} parent=1 // pred_check
      _
    $region43: #{tpu_custom_call.1} parent=1 // pred_check_branch
      %2752 = sbr.rel (0) target = $region45
    $region44: #{tpu_custom_call.1} parent=1 // pred_region
      _
    $region45: #{tpu_custom_call.1} parent=1 // pred_fallthru
      _
    // Predicated region
    $region46: #{tpu_custom_call.1} parent=1 // pred_check
      _
    $region47: #{tpu_custom_call.1} parent=1 // pred_check_branch
      %2754 = sbr.rel (0) target = $region49
    $region48: #{tpu_custom_call.1} parent=1 // pred_region
      _
    $region49: #{tpu_custom_call.1} parent=1 // pred_fallthru
      _
    %2755 = vsyncpa [#allocation4], 1
    %2756 = vsyncpa [#allocation6], 1

</llo_original>
